<compile_context>
chip_gen: v7x
topology: tpu7x:2x2x1
jax: 0.10.0
libtpu: 0.0.40
codegen_flags: <defaults>
</compile_context>

<pallas_src>
import jax
import jax.numpy as jnp
from jax.experimental import pallas as pl
from jax.experimental.pallas import tpu as pltpu

EPS = 1e-5  # nn.BatchNorm1d default eps


def _plan_tiling(B, T, Cin, H1, H2, K1, K2, pad1, pad2):
    """Pick a batch tile (divisor of B, block-constraint friendly) + VMEM cap."""
    per_b = ((T + pad1) * K1 * Cin * 2 * 2    # cols1 tile (bf16, double-buffered)
             + (T + pad1) * H1 * 4            # acc1 (f32)
             + T * H1 * 2                     # fused h1 (bf16)
             + (T + 2 * pad2) * H1 * 2        # padded-h1 VMEM scratch (bf16)
             + 2 * (T + pad2) * H2 * 4)       # acc2 f32 + its square
    const_b = ((K1 * Cin * H1 + K2 * H1 * H2) * 2   # weights (bf16)
               + 8 * (H1 + H2) * 4)                 # BN params + stats scratch
    budget = 24 << 20                         # keeps 1.5x total under ~40 MiB
    max_bt = max(1, budget // max(per_b, 1))
    # Fill the MXU: aim for >=256 rows per matmul (v6e/v7x; 128 suffices on v5e).
    want = min(B, max(1, -(-256 // (T + pad1))), max_bt)
    # The output block's second-minor dim is the batch tile -> it must equal B
    # or be a multiple of 8 to satisfy the (8, 128) block constraint.
    cands = [d for d in range(1, B + 1)
             if B % d == 0 and (d == B or d % 8 == 0)]
    fitting = [d for d in cands if d <= want]
    bt = max(fitting) if fitting else min(cands)
    vmem_bytes = int(min(max(int(1.5 * (bt * per_b + const_b)) + (2 << 20),
                             32 << 20), 40 << 20))
    return bt, vmem_bytes


def metric_model_forward(x, params):
    """x: (B, T, metric_num) float32.

    params: conv weights tap-major, w[k, cin, cout] == torch_weight[cout, cin, k];
    conv biases b1/b2 accepted but unused (exact no-op under train-mode BN);
    BN gamma/beta in f32.
    """
    B, T, Cin = x.shape
    w1, w2 = params["w1"], params["w2"]
    K1, _, H1 = w1.shape
    K2, _, H2 = w2.shape
    d1, d2 = 1, 2                         # dilation = 2 ** layer_index
    pad1 = (K1 - 1) * d1
    pad2 = (K2 - 1) * d2

    # ---- hoisted out of the kernel (perf review): block-1 im2col -----------
    xp = jnp.pad(x, ((0, 0), (pad1, pad1), (0, 0)))
    cols1 = jnp.concatenate(
        [xp[:, d1 * k: d1 * k + T + pad1, :] for k in range(K1)],
        axis=-1).astype(jnp.bfloat16)                   # (B, T+pad1, K1*Cin)

    w1_flat = w1.reshape(K1 * Cin, H1).astype(jnp.bfloat16)
    w2_taps = w2.astype(jnp.bfloat16)                   # (K2, H1, H2)
    g1 = params["g1"].reshape(1, H1).astype(jnp.float32)
    be1 = params["be1"].reshape(1, H1).astype(jnp.float32)
    g2 = params["g2"].reshape(1, H2).astype(jnp.float32)
    be2 = params["be2"].reshape(1, H2).astype(jnp.float32)
    # params["b1"], params["b2"] intentionally NOT passed (cancel under BN).

    # BN precedes Chomp1d, so training stats are over the un-chomped length.
    n1 = float(B * (T + pad1))
    n2 = float(B * (T + pad2))

    bt, vmem_bytes = _plan_tiling(B, T, Cin, H1, H2, K1, K2, pad1, pad2)
    grid = (3, B // bt)   # (phase, batch tile); phase axis must be outermost.

    def kernel(cols1_ref, w1_ref, g1_ref, be1_ref, w2_ref, g2_ref, be2_ref,
               out_ref, sum1_ref, sq1_ref, sum2_ref, sq2_ref, h1pad_ref):
        phase = pl.program_id(0)
        tile = pl.program_id(1)

        @pl.when(jnp.logical_and(phase == 0, tile == 0))
        def _init():
            sum1_ref[...] = jnp.zeros_like(sum1_ref)
            sq1_ref[...] = jnp.zeros_like(sq1_ref)
            sum2_ref[...] = jnp.zeros_like(sum2_ref)
            sq2_ref[...] = jnp.zeros_like(sq2_ref)

        def colsum(a3):  # (b, t, c) f32 -> (1, c); keep intermediates >= 2D
            return jnp.sum(jnp.sum(a3, axis=0), axis=0, keepdims=True)

        def conv1():
            # (bt, T+pad1, K1*Cin) @ (K1*Cin, H1) on the MXU, f32 accumulation.
            return jnp.einsum("btc,cf->btf", cols1_ref[...], w1_ref[...],
                              preferred_element_type=jnp.float32)

        def folded_affine(sum_ref, sq_ref, g_ref, be_ref, n):
            # Training-mode BN folded into per-channel (scale, shift). One-pass
            # stats in f32; clamp guards cancellation-induced negative var.
            mean = sum_ref[...] / n
            var = jnp.maximum(sq_ref[...] / n - mean * mean, 0.0)
            inv = jax.lax.rsqrt(var + EPS)
            scale = g_ref[...] * inv
            shift = be_ref[...] - mean * scale
            return scale, shift                          # each (1, C) f32

        def block1_act():
            # Fused BN1 affine + ReLU + bf16 downcast over the kept T steps.
            acc1 = conv1()
            sc, sh = folded_affine(sum1_ref, sq1_ref, g1_ref, be1_ref, n1)
            return jnp.maximum(acc1[:, :T, :] * sc[None] + sh[None],
                               0.0).astype(jnp.bfloat16)  # (bt, T, H1)

        def fill_h1pad(h1):
            # Padded h1 scratch: h1pad[m] == h1[m - pad2], zeros outside.
            h1pad_ref[:, :pad2, :] = jnp.zeros((bt, pad2, H1), jnp.bfloat16)
            h1pad_ref[:, pad2 + T:, :] = jnp.zeros((bt, pad2, H1), jnp.bfloat16)
            h1pad_ref[:, pad2:pad2 + T, :] = h1

        @pl.when(phase == 0)
        def _stats1():
            acc1 = conv1()
            sum1_ref[...] += colsum(acc1)
            sq1_ref[...] += colsum(acc1 * acc1)

        @pl.when(phase == 1)
        def _stats2():
            fill_h1pad(block1_act())
            # Causal dilated conv #2 = K2 per-tap matmuls accumulated in f32;
            # each tap is a static view of the padded scratch (no lane concat).
            acc2 = jnp.zeros((bt, T + pad2, H2), jnp.float32)
            for k in range(K2):
                acc2 = acc2 + jnp.einsum(
                    "btc,cf->btf",
                    h1pad_ref[:, d2 * k: d2 * k + T + pad2, :], w2_ref[k],
                    preferred_element_type=jnp.float32)
            sum2_ref[...] += colsum(acc2)
            sq2_ref[...] += colsum(acc2 * acc2)

        @pl.when(phase == 2)
        def _write():
            fill_h1pad(block1_act())
            # Output is hidden_states[:, -1, :] => only conv2 row T-1 matters;
            # its taps are h1pad rows T-1 + d2*k.
            acc2_last = jnp.zeros((bt, 1, H2), jnp.float32)
            for k in range(K2):
                acc2_last = acc2_last + jnp.einsum(
                    "btc,cf->btf",
                    h1pad_ref[:, T - 1 + d2 * k: T + d2 * k, :], w2_ref[k],
                    preferred_element_type=jnp.float32)
            sc, sh = folded_affine(sum2_ref, sq2_ref, g2_ref, be2_ref, n2)
            out_ref[...] = jnp.maximum(acc2_last[:, 0, :] * sc + sh, 0.0)

    grid_spec = pltpu.PrefetchScalarGridSpec(
        num_scalar_prefetch=0,
        grid=grid,
        in_specs=[
            pl.BlockSpec((bt, T + pad1, K1 * Cin), lambda p, i: (i, 0, 0)),
            pl.BlockSpec((K1 * Cin, H1), lambda p, i: (0, 0)),
            pl.BlockSpec((1, H1), lambda p, i: (0, 0)),
            pl.BlockSpec((1, H1), lambda p, i: (0, 0)),
            pl.BlockSpec((K2, H1, H2), lambda p, i: (0, 0, 0)),
            pl.BlockSpec((1, H2), lambda p, i: (0, 0)),
            pl.BlockSpec((1, H2), lambda p, i: (0, 0)),
        ],
        out_specs=pl.BlockSpec((bt, H2), lambda p, i: (i, 0)),
        scratch_shapes=[
            pltpu.VMEM((1, H1), jnp.float32),                  # BN1 sum
            pltpu.VMEM((1, H1), jnp.float32),                  # BN1 sumsq
            pltpu.VMEM((1, H2), jnp.float32),                  # BN2 sum
            pltpu.VMEM((1, H2), jnp.float32),                  # BN2 sumsq
            pltpu.VMEM((bt, T + 2 * pad2, H1), jnp.bfloat16),  # padded h1
        ],
    )

    # TODO(synk): on v7x, mark the batch-tile axis 'parallel' and combine the
    # per-core partial BN stats (CMEM scratch or a tiny second pallas_call) so
    # both TensorCores split the conv matmuls; kept sequential here because the
    # shared stats scratch requires ordered accumulation across tiles.
    return pl.pallas_call(
        kernel,
        out_shape=jax.ShapeDtypeStruct((B, H2), jnp.float32),
        grid_spec=grid_spec,
        compiler_params=pltpu.CompilerParams(
            dimension_semantics=("arbitrary", "arbitrary"),
            vmem_limit_bytes=vmem_bytes),
    )(cols1, w1_flat, g1, be1, w2_taps, g2, be2)


def reference_forward(x, p):
    """Independent reference with the exact torch block order:
    Conv1d (symmetric padding, bias included) -> BatchNorm1d with training-mode
    batch stats over the un-chomped length T+pad (biased variance) -> ReLU ->
    Chomp1d. Matmul/conv inputs bf16 with f32 accumulation to match the
    kernel's precision; the conv bias must cancel under train-mode BN."""
    def block(h, w, b, gamma, beta, dilation):
        B, T, _ = h.shape
        K = w.shape[0]
        pad = (K - 1) * dilation
        lhs = jnp.transpose(h, (0, 2, 1)).astype(jnp.bfloat16)   # (B, Cin, T)
        rhs = jnp.transpose(w, (2, 1, 0)).astype(jnp.bfloat16)   # (Cout, Cin, K)
        y = jax.lax.conv_general_dilated(
            lhs, rhs, window_strides=(1,), padding=[(pad, pad)],
            rhs_dilation=(dilation,),
            dimension_numbers=("NCH", "OIH", "NCH"),
            preferred_element_type=jnp.float32)                  # (B, Cout, T+pad)
        y = y + b.reshape(1, -1, 1)
        mean = jnp.mean(y, axis=(0, 2), keepdims=True)           # over T+pad
        var = jnp.mean((y - mean) ** 2, axis=(0, 2), keepdims=True)
        yn = (y - mean) * jax.lax.rsqrt(var + EPS)
        yn = yn * gamma.reshape(1, -1, 1) + beta.reshape(1, -1, 1)
        yn = jnp.maximum(yn, 0.0)
        yn = yn[:, :, :T]                                        # Chomp1d
        return jnp.transpose(yn, (0, 2, 1))                      # (B, T, Cout)

    h1 = block(x, p["w1"], p["b1"], p["g1"], p["be1"], 1)
    h2 = block(h1, p["w2"], p["b2"], p["g2"], p["be2"], 2)
    return h2[:, -1, :]


if __name__ == "__main__":
    # Shapes consistent with MetricModel(metric_num=4) defaults:
    # metric_hiddens=[64, 128], metric_kernel_sizes=[3, 3], dilation base 2.
    B, T = 2, 8
    METRIC_NUM = 4
    H1, H2 = 64, 128
    K = 3

    key = jax.random.PRNGKey(0)
    k_x, k_w1, k_b1, k_w2, k_b2 = jax.random.split(key, 5)

    x = jax.random.normal(k_x, (B, T, METRIC_NUM), dtype=jnp.float32)

    # Conv weights stored tap-major: w[k, cin, cout] == torch_weight[cout, cin, k].
    # Conv biases present (checkpoint-compatible) but a no-op under train-mode
    # BN -- the kernel drops them, the reference keeps them, and the check
    # proves they cancel.
    params = {
        "w1": 0.1 * jax.random.normal(k_w1, (K, METRIC_NUM, H1), jnp.float32),
        "b1": 0.05 * jax.random.normal(k_b1, (H1,), jnp.float32),
        "g1": jnp.ones((H1,), jnp.float32),
        "be1": jnp.zeros((H1,), jnp.float32),
        "w2": 0.1 * jax.random.normal(k_w2, (K, H1, H2), jnp.float32),
        "b2": 0.05 * jax.random.normal(k_b2, (H2,), jnp.float32),
        "g2": jnp.ones((H2,), jnp.float32),
        "be2": jnp.zeros((H2,), jnp.float32),
    }

    out = jax.block_until_ready(metric_model_forward(x, params))
    ref = jax.block_until_ready(reference_forward(x, params))

    assert out.shape == (B, H2), out.shape
    err = float(jnp.max(jnp.abs(out - ref)))
    assert jnp.allclose(out, ref, rtol=5e-3, atol=5e-3), (
        f"mismatch vs lax.conv_general_dilated reference: max abs err {err}")
    print("KERNEL_OK")
</pallas_src>

<mosaic_0001>
module attributes {stable_mosaic.version = 11 : i64} {
  func.func @kernel(%arg0: i32, %arg1: i32, %arg2: memref<2x10x12xbf16, #tpu.memory_space<vmem>>, %arg3: memref<12x64xbf16, #tpu.memory_space<vmem>>, %arg4: memref<1x64xf32, #tpu.memory_space<vmem>>, %arg5: memref<1x64xf32, #tpu.memory_space<vmem>>, %arg6: memref<3x64x128xbf16, #tpu.memory_space<vmem>>, %arg7: memref<1x128xf32, #tpu.memory_space<vmem>>, %arg8: memref<1x128xf32, #tpu.memory_space<vmem>>, %arg9: memref<2x128xf32, #tpu.memory_space<vmem>>, %arg10: memref<1x64xf32, #tpu.memory_space<vmem>>, %arg11: memref<1x64xf32, #tpu.memory_space<vmem>>, %arg12: memref<1x128xf32, #tpu.memory_space<vmem>>, %arg13: memref<1x128xf32, #tpu.memory_space<vmem>>, %arg14: memref<2x16x64xbf16, #tpu.memory_space<vmem>>) attributes {dimension_semantics = [#tpu.dimension_semantics<arbitrary>, #tpu.dimension_semantics<arbitrary>], iteration_bounds = array<i64: 3, 1>, scalar_prefetch = 0 : i64, scratch_operands = 5 : i64, tpu.core_type = #tpu.core_type<tc>, window_params = [{transform_indices = @transform_0, window_bounds = array<i64: 2, 10, 12>}, {pipeline_mode = #tpu.pipeline_mode<synchronous>, transform_indices = @transform_1, window_bounds = array<i64: 12, 64>}, {pipeline_mode = #tpu.pipeline_mode<synchronous>, transform_indices = @transform_2, window_bounds = array<i64: 1, 64>}, {pipeline_mode = #tpu.pipeline_mode<synchronous>, transform_indices = @transform_3, window_bounds = array<i64: 1, 64>}, {pipeline_mode = #tpu.pipeline_mode<synchronous>, transform_indices = @transform_4, window_bounds = array<i64: 3, 64, 128>}, {pipeline_mode = #tpu.pipeline_mode<synchronous>, transform_indices = @transform_5, window_bounds = array<i64: 1, 128>}, {pipeline_mode = #tpu.pipeline_mode<synchronous>, transform_indices = @transform_6, window_bounds = array<i64: 1, 128>}, {transform_indices = @transform_7, window_bounds = array<i64: 2, 128>}]} {
    %c0_i32 = arith.constant 0 : i32
    %0 = arith.cmpi eq, %arg0, %c0_i32 : i32
    %c0_i32_0 = arith.constant 0 : i32
    %1 = arith.cmpi eq, %arg1, %c0_i32_0 : i32
    %2 = arith.andi %0, %1 : i1
    %3 = arith.extui %2 : i1 to i32
    %c0_i32_1 = arith.constant 0 : i32
    %4 = arith.cmpi ne, %3, %c0_i32_1 : i32
    scf.if %4 {
      %cst = arith.constant 0.000000e+00 : f32
      %14 = vector.broadcast %cst : f32 to vector<1x64xf32>
      %c0 = arith.constant 0 : index
      %c0_6 = arith.constant 0 : index
      %15 = vector.load %arg10[%c0, %c0_6] : memref<1x64xf32, #tpu.memory_space<vmem>>, vector<1x64xf32>
      tpu.vector_store %arg10[%c0, %c0_6], %14 {strides = array<i32>} : memref<1x64xf32, #tpu.memory_space<vmem>>, vector<1x64xf32>,
      %cst_7 = arith.constant 0.000000e+00 : f32
      %16 = vector.broadcast %cst_7 : f32 to vector<1x64xf32>
      %c0_8 = arith.constant 0 : index
      %c0_9 = arith.constant 0 : index
      %17 = vector.load %arg11[%c0_8, %c0_9] : memref<1x64xf32, #tpu.memory_space<vmem>>, vector<1x64xf32>
      tpu.vector_store %arg11[%c0_8, %c0_9], %16 {strides = array<i32>} : memref<1x64xf32, #tpu.memory_space<vmem>>, vector<1x64xf32>,
      %cst_10 = arith.constant 0.000000e+00 : f32
      %18 = vector.broadcast %cst_10 : f32 to vector<1x128xf32>
      %c0_11 = arith.constant 0 : index
      %c0_12 = arith.constant 0 : index
      %19 = vector.load %arg12[%c0_11, %c0_12] : memref<1x128xf32, #tpu.memory_space<vmem>>, vector<1x128xf32>
      tpu.vector_store %arg12[%c0_11, %c0_12], %18 {strides = array<i32>} : memref<1x128xf32, #tpu.memory_space<vmem>>, vector<1x128xf32>,
      %cst_13 = arith.constant 0.000000e+00 : f32
      %20 = vector.broadcast %cst_13 : f32 to vector<1x128xf32>
      %c0_14 = arith.constant 0 : index
      %c0_15 = arith.constant 0 : index
      %21 = vector.load %arg13[%c0_14, %c0_15] : memref<1x128xf32, #tpu.memory_space<vmem>>, vector<1x128xf32>
      tpu.vector_store %arg13[%c0_14, %c0_15], %20 {strides = array<i32>} : memref<1x128xf32, #tpu.memory_space<vmem>>, vector<1x128xf32>,
    } else {
    }
    %c0_i32_2 = arith.constant 0 : i32
    %5 = arith.cmpi eq, %arg0, %c0_i32_2 : i32
    %6 = arith.extui %5 : i1 to i32
    %c0_i32_3 = arith.constant 0 : i32
    %7 = arith.cmpi ne, %6, %c0_i32_3 : i32
    scf.if %7 {
      %c0 = arith.constant 0 : index
      %c0_6 = arith.constant 0 : index
      %c0_7 = arith.constant 0 : index
      %14 = vector.load %arg2[%c0, %c0_6, %c0_7] : memref<2x10x12xbf16, #tpu.memory_space<vmem>>, vector<2x10x12xbf16>
      %c0_8 = arith.constant 0 : index
      %c0_9 = arith.constant 0 : index
      %15 = vector.load %arg3[%c0_8, %c0_9] : memref<12x64xbf16, #tpu.memory_space<vmem>>, vector<12x64xbf16>
      "tpu.trace_start"() <{level = 10 : i32, message = "btc,cf->btf"}> : () -> ()
      %cst = arith.constant dense<0.000000e+00> : vector<2x10x64xf32>
      %16 = tpu.matmul %14, %15, %cst {dimension_numbers = #tpu.dot_dimension_numbers<[2], [0], [0, 1], [1], [0, 0, 0, 1, 1, 1], [], []>} : vector<2x10x12xbf16>, vector<12x64xbf16>, vector<2x10x64xf32> -> vector<2x10x64xf32>
      "tpu.trace_stop"() : () -> ()
      %c0_10 = arith.constant 0 : index
      %c0_11 = arith.constant 0 : index
      %17 = vector.load %arg10[%c0_10, %c0_11] : memref<1x64xf32, #tpu.memory_space<vmem>>, vector<1x64xf32>
      %cst_12 = arith.constant dense<0.000000e+00> : vector<10x64xf32>
      %18 = vector.multi_reduction <add>, %16, %cst_12 [0] : vector<2x10x64xf32> to vector<10x64xf32>
      %cst_13 = arith.constant dense<0.000000e+00> : vector<64xf32>
      %19 = vector.multi_reduction <add>, %18, %cst_13 [0] : vector<10x64xf32> to vector<64xf32>
      %20 = vector.shape_cast %19 : vector<64xf32> to vector<1x64xf32>
      %21 = arith.addf %17, %20 : vector<1x64xf32>
      %c0_14 = arith.constant 0 : index
      %c0_15 = arith.constant 0 : index
      %22 = vector.load %arg10[%c0_14, %c0_15] : memref<1x64xf32, #tpu.memory_space<vmem>>, vector<1x64xf32>
      tpu.vector_store %arg10[%c0_14, %c0_15], %21 {strides = array<i32>} : memref<1x64xf32, #tpu.memory_space<vmem>>, vector<1x64xf32>,
      %c0_16 = arith.constant 0 : index
      %c0_17 = arith.constant 0 : index
      %23 = vector.load %arg11[%c0_16, %c0_17] : memref<1x64xf32, #tpu.memory_space<vmem>>, vector<1x64xf32>
      %24 = arith.mulf %16, %16 : vector<2x10x64xf32>
      %cst_18 = arith.constant dense<0.000000e+00> : vector<10x64xf32>
      %25 = vector.multi_reduction <add>, %24, %cst_18 [0] : vector<2x10x64xf32> to vector<10x64xf32>
      %cst_19 = arith.constant dense<0.000000e+00> : vector<64xf32>
      %26 = vector.multi_reduction <add>, %25, %cst_19 [0] : vector<10x64xf32> to vector<64xf32>
      %27 = vector.shape_cast %26 : vector<64xf32> to vector<1x64xf32>
      %28 = arith.addf %23, %27 : vector<1x64xf32>
      %c0_20 = arith.constant 0 : index
      %c0_21 = arith.constant 0 : index
      %29 = vector.load %arg11[%c0_20, %c0_21] : memref<1x64xf32, #tpu.memory_space<vmem>>, vector<1x64xf32>
      tpu.vector_store %arg11[%c0_20, %c0_21], %28 {strides = array<i32>} : memref<1x64xf32, #tpu.memory_space<vmem>>, vector<1x64xf32>,
    } else {
    }
    %c1_i32 = arith.constant 1 : i32
    %8 = arith.cmpi eq, %arg0, %c1_i32 : i32
    %9 = arith.extui %8 : i1 to i32
    %c0_i32_4 = arith.constant 0 : i32
    %10 = arith.cmpi ne, %9, %c0_i32_4 : i32
    scf.if %10 {
      %c0 = arith.constant 0 : index
      %c0_6 = arith.constant 0 : index
      %c0_7 = arith.constant 0 : index
      %14 = vector.load %arg2[%c0, %c0_6, %c0_7] : memref<2x10x12xbf16, #tpu.memory_space<vmem>>, vector<2x10x12xbf16>
      %c0_8 = arith.constant 0 : index
      %c0_9 = arith.constant 0 : index
      %15 = vector.load %arg3[%c0_8, %c0_9] : memref<12x64xbf16, #tpu.memory_space<vmem>>, vector<12x64xbf16>
      "tpu.trace_start"() <{level = 10 : i32, message = "btc,cf->btf"}> : () -> ()
      %cst = arith.constant dense<0.000000e+00> : vector<2x10x64xf32>
      %16 = tpu.matmul %14, %15, %cst {dimension_numbers = #tpu.dot_dimension_numbers<[2], [0], [0, 1], [1], [0, 0, 0, 1, 1, 1], [], []>} : vector<2x10x12xbf16>, vector<12x64xbf16>, vector<2x10x64xf32> -> vector<2x10x64xf32>
      "tpu.trace_stop"() : () -> ()
      %c0_10 = arith.constant 0 : index
      %c0_11 = arith.constant 0 : index
      %17 = vector.load %arg10[%c0_10, %c0_11] : memref<1x64xf32, #tpu.memory_space<vmem>>, vector<1x64xf32>
      %cst_12 = arith.constant 2.000000e+01 : f32
      %18 = vector.broadcast %cst_12 : f32 to vector<1x64xf32>
      %19 = arith.divf %17, %18 : vector<1x64xf32>
      %c0_13 = arith.constant 0 : index
      %c0_14 = arith.constant 0 : index
      %20 = vector.load %arg11[%c0_13, %c0_14] : memref<1x64xf32, #tpu.memory_space<vmem>>, vector<1x64xf32>
      %cst_15 = arith.constant 2.000000e+01 : f32
      %21 = vector.broadcast %cst_15 : f32 to vector<1x64xf32>
      %22 = arith.divf %20, %21 : vector<1x64xf32>
      %23 = arith.mulf %19, %19 : vector<1x64xf32>
      %24 = arith.subf %22, %23 : vector<1x64xf32>
      %cst_16 = arith.constant 0.000000e+00 : f32
      %25 = vector.broadcast %cst_16 : f32 to vector<1x64xf32>
      %26 = arith.maximumf %24, %25 : vector<1x64xf32>
      %cst_17 = arith.constant 9.99999974E-6 : f32
      %27 = vector.broadcast %cst_17 : f32 to vector<1x64xf32>
      %28 = arith.addf %26, %27 : vector<1x64xf32>
      %29 = math.rsqrt %28 : vector<1x64xf32>
      %c0_18 = arith.constant 0 : index
      %c0_19 = arith.constant 0 : index
      %30 = vector.load %arg4[%c0_18, %c0_19] : memref<1x64xf32, #tpu.memory_space<vmem>>, vector<1x64xf32>
      %31 = arith.mulf %30, %29 : vector<1x64xf32>
      %c0_20 = arith.constant 0 : index
      %c0_21 = arith.constant 0 : index
      %32 = vector.load %arg5[%c0_20, %c0_21] : memref<1x64xf32, #tpu.memory_space<vmem>>, vector<1x64xf32>
      %33 = arith.mulf %19, %31 : vector<1x64xf32>
      %34 = arith.subf %32, %33 : vector<1x64xf32>
      %35 = vector.extract_strided_slice %16 {offsets = [0, 0, 0], sizes = [2, 8, 64], strides = [1, 1, 1]} : vector<2x10x64xf32> to vector<2x8x64xf32>
      %36 = vector.shape_cast %31 : vector<1x64xf32> to vector<1x1x64xf32>
      %37 = vector.broadcast %36 : vector<1x1x64xf32> to vector<2x8x64xf32>
      %38 = arith.mulf %35, %37 : vector<2x8x64xf32>
      %39 = vector.shape_cast %34 : vector<1x64xf32> to vector<1x1x64xf32>
      %40 = vector.broadcast %39 : vector<1x1x64xf32> to vector<2x8x64xf32>
      %41 = arith.addf %38, %40 : vector<2x8x64xf32>
      %cst_22 = arith.constant 0.000000e+00 : f32
      %42 = vector.broadcast %cst_22 : f32 to vector<2x8x64xf32>
      %43 = arith.maximumf %41, %42 : vector<2x8x64xf32>
      %44 = arith.truncf %43 : vector<2x8x64xf32> to vector<2x8x64xbf16>
      %cst_23 = arith.constant 0.000000e+00 : bf16
      %45 = vector.broadcast %cst_23 : bf16 to vector<2x4x64xbf16>
      %c0_24 = arith.constant 0 : index
      %c0_25 = arith.constant 0 : index
      %c0_26 = arith.constant 0 : index
      %46 = vector.load %arg14[%c0_24, %c0_25, %c0_26] : memref<2x16x64xbf16, #tpu.memory_space<vmem>>, vector<2x4x64xbf16>
      tpu.vector_store %arg14[%c0_24, %c0_25, %c0_26], %45 {strides = array<i32>} : memref<2x16x64xbf16, #tpu.memory_space<vmem>>, vector<2x4x64xbf16>,
      %cst_27 = arith.constant 0.000000e+00 : bf16
      %47 = vector.broadcast %cst_27 : bf16 to vector<2x4x64xbf16>
      %c0_28 = arith.constant 0 : index
      %c12 = arith.constant 12 : index
      %c0_29 = arith.constant 0 : index
      %48 = vector.load %arg14[%c0_28, %c12, %c0_29] : memref<2x16x64xbf16, #tpu.memory_space<vmem>>, vector<2x4x64xbf16>
      tpu.vector_store %arg14[%c0_28, %c12, %c0_29], %47 {strides = array<i32>} : memref<2x16x64xbf16, #tpu.memory_space<vmem>>, vector<2x4x64xbf16>,
      %c0_30 = arith.constant 0 : index
      %c4 = arith.constant 4 : index
      %c0_31 = arith.constant 0 : index
      %49 = vector.load %arg14[%c0_30, %c4, %c0_31] : memref<2x16x64xbf16, #tpu.memory_space<vmem>>, vector<2x8x64xbf16>
      tpu.vector_store %arg14[%c0_30, %c4, %c0_31], %44 {strides = array<i32>} : memref<2x16x64xbf16, #tpu.memory_space<vmem>>, vector<2x8x64xbf16>,
      %cst_32 = arith.constant 0.000000e+00 : f32
      %50 = vector.broadcast %cst_32 : f32 to vector<2x12x128xf32>
      %c0_33 = arith.constant 0 : index
      %c0_34 = arith.constant 0 : index
      %c0_35 = arith.constant 0 : index
      %51 = vector.load %arg14[%c0_33, %c0_34, %c0_35] : memref<2x16x64xbf16, #tpu.memory_space<vmem>>, vector<2x12x64xbf16>
      %c0_36 = arith.constant 0 : index
      %c0_37 = arith.constant 0 : index
      %c0_38 = arith.constant 0 : index
      %52 = vector.load %arg6[%c0_36, %c0_37, %c0_38] : memref<3x64x128xbf16, #tpu.memory_space<vmem>>, vector<1x64x128xbf16>
      %53 = vector.shape_cast %52 : vector<1x64x128xbf16> to vector<64x128xbf16>
      "tpu.trace_start"() <{level = 10 : i32, message = "btc,cf->btf"}> : () -> ()
      %cst_39 = arith.constant dense<0.000000e+00> : vector<2x12x128xf32>
      %54 = tpu.matmul %51, %53, %cst_39 {dimension_numbers = #tpu.dot_dimension_numbers<[2], [0], [0, 1], [1], [0, 0, 0, 1, 1, 1], [], []>} : vector<2x12x64xbf16>, vector<64x128xbf16>, vector<2x12x128xf32> -> vector<2x12x128xf32>
      "tpu.trace_stop"() : () -> ()
      %55 = arith.addf %50, %54 : vector<2x12x128xf32>
      %c0_40 = arith.constant 0 : index
      %c2 = arith.constant 2 : index
      %c0_41 = arith.constant 0 : index
      %56 = vector.load %arg14[%c0_40, %c2, %c0_41] : memref<2x16x64xbf16, #tpu.memory_space<vmem>>, vector<2x12x64xbf16>
      %c1 = arith.constant 1 : index
      %c0_42 = arith.constant 0 : index
      %c0_43 = arith.constant 0 : index
      %57 = vector.load %arg6[%c1, %c0_42, %c0_43] : memref<3x64x128xbf16, #tpu.memory_space<vmem>>, vector<1x64x128xbf16>
      %58 = vector.shape_cast %57 : vector<1x64x128xbf16> to vector<64x128xbf16>
      "tpu.trace_start"() <{level = 10 : i32, message = "btc,cf->btf"}> : () -> ()
      %cst_44 = arith.constant dense<0.000000e+00> : vector<2x12x128xf32>
      %59 = tpu.matmul %56, %58, %cst_44 {dimension_numbers = #tpu.dot_dimension_numbers<[2], [0], [0, 1], [1], [0, 0, 0, 1, 1, 1], [], []>} : vector<2x12x64xbf16>, vector<64x128xbf16>, vector<2x12x128xf32> -> vector<2x12x128xf32>
      "tpu.trace_stop"() : () -> ()
      %60 = arith.addf %55, %59 : vector<2x12x128xf32>
      %c0_45 = arith.constant 0 : index
      %c4_46 = arith.constant 4 : index
      %c0_47 = arith.constant 0 : index
      %61 = vector.load %arg14[%c0_45, %c4_46, %c0_47] : memref<2x16x64xbf16, #tpu.memory_space<vmem>>, vector<2x12x64xbf16>
      %c2_48 = arith.constant 2 : index
      %c0_49 = arith.constant 0 : index
      %c0_50 = arith.constant 0 : index
      %62 = vector.load %arg6[%c2_48, %c0_49, %c0_50] : memref<3x64x128xbf16, #tpu.memory_space<vmem>>, vector<1x64x128xbf16>
      %63 = vector.shape_cast %62 : vector<1x64x128xbf16> to vector<64x128xbf16>
      "tpu.trace_start"() <{level = 10 : i32, message = "btc,cf->btf"}> : () -> ()
      %cst_51 = arith.constant dense<0.000000e+00> : vector<2x12x128xf32>
      %64 = tpu.matmul %61, %63, %cst_51 {dimension_numbers = #tpu.dot_dimension_numbers<[2], [0], [0, 1], [1], [0, 0, 0, 1, 1, 1], [], []>} : vector<2x12x64xbf16>, vector<64x128xbf16>, vector<2x12x128xf32> -> vector<2x12x128xf32>
      "tpu.trace_stop"() : () -> ()
      %65 = arith.addf %60, %64 : vector<2x12x128xf32>
      %c0_52 = arith.constant 0 : index
      %c0_53 = arith.constant 0 : index
      %66 = vector.load %arg12[%c0_52, %c0_53] : memref<1x128xf32, #tpu.memory_space<vmem>>, vector<1x128xf32>
      %cst_54 = arith.constant dense<0.000000e+00> : vector<12x128xf32>
      %67 = vector.multi_reduction <add>, %65, %cst_54 [0] : vector<2x12x128xf32> to vector<12x128xf32>
      %cst_55 = arith.constant dense<0.000000e+00> : vector<128xf32>
      %68 = vector.multi_reduction <add>, %67, %cst_55 [0] : vector<12x128xf32> to vector<128xf32>
      %69 = vector.shape_cast %68 : vector<128xf32> to vector<1x128xf32>
      %70 = arith.addf %66, %69 : vector<1x128xf32>
      %c0_56 = arith.constant 0 : index
      %c0_57 = arith.constant 0 : index
      %71 = vector.load %arg12[%c0_56, %c0_57] : memref<1x128xf32, #tpu.memory_space<vmem>>, vector<1x128xf32>
      tpu.vector_store %arg12[%c0_56, %c0_57], %70 {strides = array<i32>} : memref<1x128xf32, #tpu.memory_space<vmem>>, vector<1x128xf32>,
      %c0_58 = arith.constant 0 : index
      %c0_59 = arith.constant 0 : index
      %72 = vector.load %arg13[%c0_58, %c0_59] : memref<1x128xf32, #tpu.memory_space<vmem>>, vector<1x128xf32>
      %73 = arith.mulf %65, %65 : vector<2x12x128xf32>
      %cst_60 = arith.constant dense<0.000000e+00> : vector<12x128xf32>
      %74 = vector.multi_reduction <add>, %73, %cst_60 [0] : vector<2x12x128xf32> to vector<12x128xf32>
      %cst_61 = arith.constant dense<0.000000e+00> : vector<128xf32>
      %75 = vector.multi_reduction <add>, %74, %cst_61 [0] : vector<12x128xf32> to vector<128xf32>
      %76 = vector.shape_cast %75 : vector<128xf32> to vector<1x128xf32>
      %77 = arith.addf %72, %76 : vector<1x128xf32>
      %c0_62 = arith.constant 0 : index
      %c0_63 = arith.constant 0 : index
      %78 = vector.load %arg13[%c0_62, %c0_63] : memref<1x128xf32, #tpu.memory_space<vmem>>, vector<1x128xf32>
      tpu.vector_store %arg13[%c0_62, %c0_63], %77 {strides = array<i32>} : memref<1x128xf32, #tpu.memory_space<vmem>>, vector<1x128xf32>,
    } else {
    }
    %c2_i32 = arith.constant 2 : i32
    %11 = arith.cmpi eq, %arg0, %c2_i32 : i32
    %12 = arith.extui %11 : i1 to i32
    %c0_i32_5 = arith.constant 0 : i32
    %13 = arith.cmpi ne, %12, %c0_i32_5 : i32
    scf.if %13 {
      %c0 = arith.constant 0 : index
      %c0_6 = arith.constant 0 : index
      %c0_7 = arith.constant 0 : index
      %14 = vector.load %arg2[%c0, %c0_6, %c0_7] : memref<2x10x12xbf16, #tpu.memory_space<vmem>>, vector<2x10x12xbf16>
      %c0_8 = arith.constant 0 : index
      %c0_9 = arith.constant 0 : index
      %15 = vector.load %arg3[%c0_8, %c0_9] : memref<12x64xbf16, #tpu.memory_space<vmem>>, vector<12x64xbf16>
      "tpu.trace_start"() <{level = 10 : i32, message = "btc,cf->btf"}> : () -> ()
      %cst = arith.constant dense<0.000000e+00> : vector<2x10x64xf32>
      %16 = tpu.matmul %14, %15, %cst {dimension_numbers = #tpu.dot_dimension_numbers<[2], [0], [0, 1], [1], [0, 0, 0, 1, 1, 1], [], []>} : vector<2x10x12xbf16>, vector<12x64xbf16>, vector<2x10x64xf32> -> vector<2x10x64xf32>
      "tpu.trace_stop"() : () -> ()
      %c0_10 = arith.constant 0 : index
      %c0_11 = arith.constant 0 : index
      %17 = vector.load %arg10[%c0_10, %c0_11] : memref<1x64xf32, #tpu.memory_space<vmem>>, vector<1x64xf32>
      %cst_12 = arith.constant 2.000000e+01 : f32
      %18 = vector.broadcast %cst_12 : f32 to vector<1x64xf32>
      %19 = arith.divf %17, %18 : vector<1x64xf32>
      %c0_13 = arith.constant 0 : index
      %c0_14 = arith.constant 0 : index
      %20 = vector.load %arg11[%c0_13, %c0_14] : memref<1x64xf32, #tpu.memory_space<vmem>>, vector<1x64xf32>
      %cst_15 = arith.constant 2.000000e+01 : f32
      %21 = vector.broadcast %cst_15 : f32 to vector<1x64xf32>
      %22 = arith.divf %20, %21 : vector<1x64xf32>
      %23 = arith.mulf %19, %19 : vector<1x64xf32>
      %24 = arith.subf %22, %23 : vector<1x64xf32>
      %cst_16 = arith.constant 0.000000e+00 : f32
      %25 = vector.broadcast %cst_16 : f32 to vector<1x64xf32>
      %26 = arith.maximumf %24, %25 : vector<1x64xf32>
      %cst_17 = arith.constant 9.99999974E-6 : f32
      %27 = vector.broadcast %cst_17 : f32 to vector<1x64xf32>
      %28 = arith.addf %26, %27 : vector<1x64xf32>
      %29 = math.rsqrt %28 : vector<1x64xf32>
      %c0_18 = arith.constant 0 : index
      %c0_19 = arith.constant 0 : index
      %30 = vector.load %arg4[%c0_18, %c0_19] : memref<1x64xf32, #tpu.memory_space<vmem>>, vector<1x64xf32>
      %31 = arith.mulf %30, %29 : vector<1x64xf32>
      %c0_20 = arith.constant 0 : index
      %c0_21 = arith.constant 0 : index
      %32 = vector.load %arg5[%c0_20, %c0_21] : memref<1x64xf32, #tpu.memory_space<vmem>>, vector<1x64xf32>
      %33 = arith.mulf %19, %31 : vector<1x64xf32>
      %34 = arith.subf %32, %33 : vector<1x64xf32>
      %35 = vector.extract_strided_slice %16 {offsets = [0, 0, 0], sizes = [2, 8, 64], strides = [1, 1, 1]} : vector<2x10x64xf32> to vector<2x8x64xf32>
      %36 = vector.shape_cast %31 : vector<1x64xf32> to vector<1x1x64xf32>
      %37 = vector.broadcast %36 : vector<1x1x64xf32> to vector<2x8x64xf32>
      %38 = arith.mulf %35, %37 : vector<2x8x64xf32>
      %39 = vector.shape_cast %34 : vector<1x64xf32> to vector<1x1x64xf32>
      %40 = vector.broadcast %39 : vector<1x1x64xf32> to vector<2x8x64xf32>
      %41 = arith.addf %38, %40 : vector<2x8x64xf32>
      %cst_22 = arith.constant 0.000000e+00 : f32
      %42 = vector.broadcast %cst_22 : f32 to vector<2x8x64xf32>
      %43 = arith.maximumf %41, %42 : vector<2x8x64xf32>
      %44 = arith.truncf %43 : vector<2x8x64xf32> to vector<2x8x64xbf16>
      %cst_23 = arith.constant 0.000000e+00 : bf16
      %45 = vector.broadcast %cst_23 : bf16 to vector<2x4x64xbf16>
      %c0_24 = arith.constant 0 : index
      %c0_25 = arith.constant 0 : index
      %c0_26 = arith.constant 0 : index
      %46 = vector.load %arg14[%c0_24, %c0_25, %c0_26] : memref<2x16x64xbf16, #tpu.memory_space<vmem>>, vector<2x4x64xbf16>
      tpu.vector_store %arg14[%c0_24, %c0_25, %c0_26], %45 {strides = array<i32>} : memref<2x16x64xbf16, #tpu.memory_space<vmem>>, vector<2x4x64xbf16>,
      %cst_27 = arith.constant 0.000000e+00 : bf16
      %47 = vector.broadcast %cst_27 : bf16 to vector<2x4x64xbf16>
      %c0_28 = arith.constant 0 : index
      %c12 = arith.constant 12 : index
      %c0_29 = arith.constant 0 : index
      %48 = vector.load %arg14[%c0_28, %c12, %c0_29] : memref<2x16x64xbf16, #tpu.memory_space<vmem>>, vector<2x4x64xbf16>
      tpu.vector_store %arg14[%c0_28, %c12, %c0_29], %47 {strides = array<i32>} : memref<2x16x64xbf16, #tpu.memory_space<vmem>>, vector<2x4x64xbf16>,
      %c0_30 = arith.constant 0 : index
      %c4 = arith.constant 4 : index
      %c0_31 = arith.constant 0 : index
      %49 = vector.load %arg14[%c0_30, %c4, %c0_31] : memref<2x16x64xbf16, #tpu.memory_space<vmem>>, vector<2x8x64xbf16>
      tpu.vector_store %arg14[%c0_30, %c4, %c0_31], %44 {strides = array<i32>} : memref<2x16x64xbf16, #tpu.memory_space<vmem>>, vector<2x8x64xbf16>,
      %cst_32 = arith.constant 0.000000e+00 : f32
      %50 = vector.broadcast %cst_32 : f32 to vector<2x1x128xf32>
      %c0_33 = arith.constant 0 : index
      %c7 = arith.constant 7 : index
      %c0_34 = arith.constant 0 : index
      %51 = vector.load %arg14[%c0_33, %c7, %c0_34] : memref<2x16x64xbf16, #tpu.memory_space<vmem>>, vector<2x1x64xbf16>
      %c0_35 = arith.constant 0 : index
      %c0_36 = arith.constant 0 : index
      %c0_37 = arith.constant 0 : index
      %52 = vector.load %arg6[%c0_35, %c0_36, %c0_37] : memref<3x64x128xbf16, #tpu.memory_space<vmem>>, vector<1x64x128xbf16>
      %53 = vector.shape_cast %52 : vector<1x64x128xbf16> to vector<64x128xbf16>
      "tpu.trace_start"() <{level = 10 : i32, message = "btc,cf->btf"}> : () -> ()
      %cst_38 = arith.constant dense<0.000000e+00> : vector<2x1x128xf32>
      %54 = tpu.matmul %51, %53, %cst_38 {dimension_numbers = #tpu.dot_dimension_numbers<[2], [0], [0, 1], [1], [0, 0, 0, 1, 1, 1], [], []>} : vector<2x1x64xbf16>, vector<64x128xbf16>, vector<2x1x128xf32> -> vector<2x1x128xf32>
      "tpu.trace_stop"() : () -> ()
      %55 = arith.addf %50, %54 : vector<2x1x128xf32>
      %c0_39 = arith.constant 0 : index
      %c9 = arith.constant 9 : index
      %c0_40 = arith.constant 0 : index
      %56 = vector.load %arg14[%c0_39, %c9, %c0_40] : memref<2x16x64xbf16, #tpu.memory_space<vmem>>, vector<2x1x64xbf16>
      %c1 = arith.constant 1 : index
      %c0_41 = arith.constant 0 : index
      %c0_42 = arith.constant 0 : index
      %57 = vector.load %arg6[%c1, %c0_41, %c0_42] : memref<3x64x128xbf16, #tpu.memory_space<vmem>>, vector<1x64x128xbf16>
      %58 = vector.shape_cast %57 : vector<1x64x128xbf16> to vector<64x128xbf16>
      "tpu.trace_start"() <{level = 10 : i32, message = "btc,cf->btf"}> : () -> ()
      %cst_43 = arith.constant dense<0.000000e+00> : vector<2x1x128xf32>
      %59 = tpu.matmul %56, %58, %cst_43 {dimension_numbers = #tpu.dot_dimension_numbers<[2], [0], [0, 1], [1], [0, 0, 0, 1, 1, 1], [], []>} : vector<2x1x64xbf16>, vector<64x128xbf16>, vector<2x1x128xf32> -> vector<2x1x128xf32>
      "tpu.trace_stop"() : () -> ()
      %60 = arith.addf %55, %59 : vector<2x1x128xf32>
      %c0_44 = arith.constant 0 : index
      %c11 = arith.constant 11 : index
      %c0_45 = arith.constant 0 : index
      %61 = vector.load %arg14[%c0_44, %c11, %c0_45] : memref<2x16x64xbf16, #tpu.memory_space<vmem>>, vector<2x1x64xbf16>
      %c2 = arith.constant 2 : index
      %c0_46 = arith.constant 0 : index
      %c0_47 = arith.constant 0 : index
      %62 = vector.load %arg6[%c2, %c0_46, %c0_47] : memref<3x64x128xbf16, #tpu.memory_space<vmem>>, vector<1x64x128xbf16>
      %63 = vector.shape_cast %62 : vector<1x64x128xbf16> to vector<64x128xbf16>
      "tpu.trace_start"() <{level = 10 : i32, message = "btc,cf->btf"}> : () -> ()
      %cst_48 = arith.constant dense<0.000000e+00> : vector<2x1x128xf32>
      %64 = tpu.matmul %61, %63, %cst_48 {dimension_numbers = #tpu.dot_dimension_numbers<[2], [0], [0, 1], [1], [0, 0, 0, 1, 1, 1], [], []>} : vector<2x1x64xbf16>, vector<64x128xbf16>, vector<2x1x128xf32> -> vector<2x1x128xf32>
      "tpu.trace_stop"() : () -> ()
      %65 = arith.addf %60, %64 : vector<2x1x128xf32>
      %c0_49 = arith.constant 0 : index
      %c0_50 = arith.constant 0 : index
      %66 = vector.load %arg12[%c0_49, %c0_50] : memref<1x128xf32, #tpu.memory_space<vmem>>, vector<1x128xf32>
      %cst_51 = arith.constant 2.400000e+01 : f32
      %67 = vector.broadcast %cst_51 : f32 to vector<1x128xf32>
      %68 = arith.divf %66, %67 : vector<1x128xf32>
      %c0_52 = arith.constant 0 : index
      %c0_53 = arith.constant 0 : index
      %69 = vector.load %arg13[%c0_52, %c0_53] : memref<1x128xf32, #tpu.memory_space<vmem>>, vector<1x128xf32>
      %cst_54 = arith.constant 2.400000e+01 : f32
      %70 = vector.broadcast %cst_54 : f32 to vector<1x128xf32>
      %71 = arith.divf %69, %70 : vector<1x128xf32>
      %72 = arith.mulf %68, %68 : vector<1x128xf32>
      %73 = arith.subf %71, %72 : vector<1x128xf32>
      %cst_55 = arith.constant 0.000000e+00 : f32
      %74 = vector.broadcast %cst_55 : f32 to vector<1x128xf32>
      %75 = arith.maximumf %73, %74 : vector<1x128xf32>
      %cst_56 = arith.constant 9.99999974E-6 : f32
      %76 = vector.broadcast %cst_56 : f32 to vector<1x128xf32>
      %77 = arith.addf %75, %76 : vector<1x128xf32>
      %78 = math.rsqrt %77 : vector<1x128xf32>
      %c0_57 = arith.constant 0 : index
      %c0_58 = arith.constant 0 : index
      %79 = vector.load %arg7[%c0_57, %c0_58] : memref<1x128xf32, #tpu.memory_space<vmem>>, vector<1x128xf32>
      %80 = arith.mulf %79, %78 : vector<1x128xf32>
      %c0_59 = arith.constant 0 : index
      %c0_60 = arith.constant 0 : index
      %81 = vector.load %arg8[%c0_59, %c0_60] : memref<1x128xf32, #tpu.memory_space<vmem>>, vector<1x128xf32>
      %82 = arith.mulf %68, %80 : vector<1x128xf32>
      %83 = arith.subf %81, %82 : vector<1x128xf32>
      %84 = vector.shape_cast %65 : vector<2x1x128xf32> to vector<2x128xf32>
      %85 = vector.broadcast %80 : vector<1x128xf32> to vector<2x128xf32>
      %86 = arith.mulf %84, %85 : vector<2x128xf32>
      %87 = vector.broadcast %83 : vector<1x128xf32> to vector<2x128xf32>
      %88 = arith.addf %86, %87 : vector<2x128xf32>
      %cst_61 = arith.constant 0.000000e+00 : f32
      %89 = vector.broadcast %cst_61 : f32 to vector<2x128xf32>
      %90 = arith.maximumf %88, %89 : vector<2x128xf32>
      %c0_62 = arith.constant 0 : index
      %c0_63 = arith.constant 0 : index
      %91 = vector.load %arg9[%c0_62, %c0_63] : memref<2x128xf32, #tpu.memory_space<vmem>>, vector<2x128xf32>
      tpu.vector_store %arg9[%c0_62, %c0_63], %90 {strides = array<i32>} : memref<2x128xf32, #tpu.memory_space<vmem>>, vector<2x128xf32>,
    } else {
    }
    return
  }
  func.func @transform_0(%arg0: i32, %arg1: i32) -> (i32, i32, i32) {
    %c0_i32 = arith.constant 0 : i32
    %c0_i32_0 = arith.constant 0 : i32
    %c0_i32_1 = arith.constant 0 : i32
    return %arg1, %c0_i32, %c0_i32_0 : i32, i32, i32
  }
  func.func @transform_1(%arg0: i32, %arg1: i32) -> (i32, i32) {
    %c0_i32 = arith.constant 0 : i32
    %c0_i32_0 = arith.constant 0 : i32
    %c0_i32_1 = arith.constant 0 : i32
    return %c0_i32, %c0_i32_0 : i32, i32
  }
  func.func @transform_2(%arg0: i32, %arg1: i32) -> (i32, i32) {
    %c0_i32 = arith.constant 0 : i32
    %c0_i32_0 = arith.constant 0 : i32
    %c0_i32_1 = arith.constant 0 : i32
    return %c0_i32, %c0_i32_0 : i32, i32
  }
  func.func @transform_3(%arg0: i32, %arg1: i32) -> (i32, i32) {
    %c0_i32 = arith.constant 0 : i32
    %c0_i32_0 = arith.constant 0 : i32
    %c0_i32_1 = arith.constant 0 : i32
    return %c0_i32, %c0_i32_0 : i32, i32
  }
  func.func @transform_4(%arg0: i32, %arg1: i32) -> (i32, i32, i32) {
    %c0_i32 = arith.constant 0 : i32
    %c0_i32_0 = arith.constant 0 : i32
    %c0_i32_1 = arith.constant 0 : i32
    %c0_i32_2 = arith.constant 0 : i32
    return %c0_i32, %c0_i32_0, %c0_i32_1 : i32, i32, i32
  }
  func.func @transform_5(%arg0: i32, %arg1: i32) -> (i32, i32) {
    %c0_i32 = arith.constant 0 : i32
    %c0_i32_0 = arith.constant 0 : i32
    %c0_i32_1 = arith.constant 0 : i32
    return %c0_i32, %c0_i32_0 : i32, i32
  }
  func.func @transform_6(%arg0: i32, %arg1: i32) -> (i32, i32) {
    %c0_i32 = arith.constant 0 : i32
    %c0_i32_0 = arith.constant 0 : i32
    %c0_i32_1 = arith.constant 0 : i32
    return %c0_i32, %c0_i32_0 : i32, i32
  }
  func.func @transform_7(%arg0: i32, %arg1: i32) -> (i32, i32) {
    %c0_i32 = arith.constant 0 : i32
    %c0_i32_0 = arith.constant 0 : i32
    return %arg1, %c0_i32 : i32, i32
  }
}

</mosaic_0001>

<llo_original>
// kernel: tpu_custom_call.1
$region0: #{tpu_custom_call.1}
  #allocation0 [shape = 'u32[]', space=smem, size = 0x4, offset = 0x4, fixed_abs, tag = 'smem constant byte address 0x4 - core index']
  #allocation1 [shape = 'u32[144,128]{1,0:T(1,128)}', space=vmem, size = 0x12000, scoped, tag = 'internal scratch']
  #allocation2 [shape = 'f32[1,64]{1,0:T(1,128)}', space=vmem, size = 0x200, scoped, tag = 'scratch operand']
  #allocation3 [shape = 'f32[1,64]{1,0:T(1,128)}', space=vmem, size = 0x200, scoped, tag = 'scratch operand']
  #allocation4 [shape = 'f32[1,128]{1,0:T(1,128)}', space=vmem, size = 0x200, scoped, tag = 'scratch operand']
  #allocation5 [shape = 'f32[1,128]{1,0:T(1,128)}', space=vmem, size = 0x200, scoped, tag = 'scratch operand']
  #allocation6 [shape = 'bf16[2,16,64]{2,1,0:T(16,128)(2,1)}', space=vmem, size = 0x2000, scoped, tag = 'scratch operand']
  %s0 = inlined_call_operand.vmem [shape: bf16[2,10,12], index: 0, kind: input, shape index: {}]
  %s1 = inlined_call_operand.vmem [shape: bf16[12,64], index: 1, kind: input, shape index: {}]
  %s2 = inlined_call_operand.vmem [shape: f32[1,64], index: 2, kind: input, shape index: {}]
  %s3 = inlined_call_operand.vmem [shape: f32[1,64], index: 3, kind: input, shape index: {}]
  %s4 = inlined_call_operand.hbm [shape: bf16[3,64,128], index: 4, kind: input, shape index: {}]
  %s5 = inlined_call_operand.vmem [shape: f32[1,128], index: 5, kind: input, shape index: {}]
  %s6 = inlined_call_operand.vmem [shape: f32[1,128], index: 6, kind: input, shape index: {}]
  %s7 = inlined_call_operand.hbm [shape: f32[2,128], index: 7, kind: output, shape index: {}]
  %s8 = sld [smem:[#allocation0]]
  $region81: #{tpu_custom_call.1} parent=0
    _
  %s10 = ssub.s32 1, %s8
  %s11 = scalar_select 0, %s10, %s8
  $region1: #{tpu_custom_call.1} parent=0
    #allocation7 [shape = 'u8[49152]{0}', space=vmem, size = 0xc000, scoped, tag = 'input window, operand 4, single buffered']
    #allocation8 [shape = 's32[2]{0}', space=sflag, size = 0x8, scoped, tag = 'scoped memory for tpu_custom_call.1']
    #allocation9 [shape = 's32[2]{0}', space=sflag, size = 0x8, scoped, tag = 'scoped memory for tpu_custom_call.1']
    #allocation10 [shape = 'u8[1024]{0}', space=vmem, size = 0x400, scoped, tag = 'output window, operand 0, single buffered']
    %12 = vsyncpa [#allocation8], 0
    %13 = vsyncpa [#allocation9], 0
    loop: start=0, step=1, limit=5
    $region2: #{tpu_custom_call.1} parent=1 // loop_pre_header
      _
    $region3: #{tpu_custom_call.1} parent=1 // loop_header
      %s15 = sphi 0, %s19
      %p16 = scmp.ge.s32.totalorder %s15, 5
      %s22 = sphi 0, %s34
      %s23 = sphi 0, %s30
      %s24 = sphi 0, %s22
      %s25 = sphi 0, %s23
      %s26 = sphi 0, %s24
      %s27 = sphi 0, %s25
      %s37 = sphi 0, %s39
      %s40 = sphi 0, %s37
      %s41 = sphi 0, %s40
      %s57 = sphi 0, %s41
      %s61 = sphi 0, %s61
      %s63 = sphi 0, %s61
      %s64 = sphi 0, %s63
      %s78 = sphi 0, %s64
      %s82 = sphi 0, %s82
      %s84 = sphi 0, %s82
      %s85 = sphi 0, %s84
      %s99 = sphi 0, %s85
      %s103 = sphi 0, %s103
      %s105 = sphi 0, %s103
      %s106 = sphi 0, %s105
      %s120 = sphi 0, %s106
      %s124 = sphi 0, %s124
      %s126 = sphi 0, %s124
      %s127 = sphi 0, %s126
      %s141 = sphi 0, %s127
      %s145 = sphi 0, %s145
      %s147 = sphi 0, %s145
      %s148 = sphi 0, %s147
      %s162 = sphi 0, %s148
      %s166 = sphi 0, %s166
      %s168 = sphi 0, %s166
      %s169 = sphi 0, %s168
      %s183 = sphi 0, %s169
      %s189 = sphi 0, %s191
      %s192 = sphi 0, %s189
      %s193 = sphi 0, %s192
      %s209 = sphi 0, %s193
    $region4: #{tpu_custom_call.1} parent=1 // loop_header_branch
      %18 = sbr.rel (%p16) target = $region8
    $region5: #{tpu_custom_call.1} parent=1 // loop_body
      %s20 = ssub.s32 %s15, 1
      %s21 = ssub.s32 %s15, 2
      %s28 = sadd.s32 1, %s23
      %p29 = scmp.ge.s32.totalorder %s28, 1
      %s30 = scalar_select %p29, 0, %s28
      %s31 = sadd.s32 1, %s22
      %s32 = scalar_select %p29, %s31, %s22
      %p33 = scmp.ge.s32.totalorder %s32, 3
      %s34 = scalar_select %p33, 0, %s32
      %s35 = ssub.s32 %s23, %s30
      %p36 = scmp.eq.s32.totalorder %s35, 0
      %s38 = sadd.s32 %s37, 1
      %s39 = scalar_select %p36, %s37, %s38
      %p42 = pneg %p36
      %p43 = scmp.eq.s32.totalorder %s15, 2
      %p44 = por %p42, %p43
      %p45 = scmp.ne.s32.totalorder %s37, %s40
      %p46 = scmp.eq.s32.totalorder %s15, 0
      %p47 = por %p45, %p46
      %p48 = scmp.ne.s32.totalorder %s37, %s40
      %p49 = scmp.eq.s32.totalorder %s20, 2
      %p50 = por %p48, %p49
      %p51 = scmp.ne.s32.totalorder %s40, %s41
      %p52 = scmp.eq.s32.totalorder %s20, 0
      %p53 = por %p51, %p52
      %p54 = scmp.ne.s32.totalorder %s40, %s41
      %p55 = scmp.eq.s32.totalorder %s21, 2
      %p56 = por %p54, %p55
      %p58 = scmp.ne.s32.totalorder %s41, %s57
      %p59 = scmp.eq.s32.totalorder %s21, 0
      %p60 = por %p58, %p59
      %s62 = sadd.s32 %s61, 1
      %p65 = scmp.eq.s32.totalorder %s15, 2
      %p66 = scmp.ne.s32.totalorder %s61, %s63
      %p67 = scmp.eq.s32.totalorder %s15, 0
      %p68 = por %p66, %p67
      %p69 = scmp.ne.s32.totalorder %s61, %s63
      %p70 = scmp.eq.s32.totalorder %s20, 2
      %p71 = por %p69, %p70
      %p72 = scmp.ne.s32.totalorder %s63, %s64
      %p73 = scmp.eq.s32.totalorder %s20, 0
      %p74 = por %p72, %p73
      %p75 = scmp.ne.s32.totalorder %s63, %s64
      %p76 = scmp.eq.s32.totalorder %s21, 2
      %p77 = por %p75, %p76
      %p79 = scmp.ne.s32.totalorder %s64, %s78
      %p80 = scmp.eq.s32.totalorder %s21, 0
      %p81 = por %p79, %p80
      %s83 = sadd.s32 %s82, 1
      %p86 = scmp.eq.s32.totalorder %s15, 2
      %p87 = scmp.ne.s32.totalorder %s82, %s84
      %p88 = scmp.eq.s32.totalorder %s15, 0
      %p89 = por %p87, %p88
      %p90 = scmp.ne.s32.totalorder %s82, %s84
      %p91 = scmp.eq.s32.totalorder %s20, 2
      %p92 = por %p90, %p91
      %p93 = scmp.ne.s32.totalorder %s84, %s85
      %p94 = scmp.eq.s32.totalorder %s20, 0
      %p95 = por %p93, %p94
      %p96 = scmp.ne.s32.totalorder %s84, %s85
      %p97 = scmp.eq.s32.totalorder %s21, 2
      %p98 = por %p96, %p97
      %p100 = scmp.ne.s32.totalorder %s85, %s99
      %p101 = scmp.eq.s32.totalorder %s21, 0
      %p102 = por %p100, %p101
      %s104 = sadd.s32 %s103, 1
      %p107 = scmp.eq.s32.totalorder %s15, 2
      %p108 = scmp.ne.s32.totalorder %s103, %s105
      %p109 = scmp.eq.s32.totalorder %s15, 0
      %p110 = por %p108, %p109
      %p111 = scmp.ne.s32.totalorder %s103, %s105
      %p112 = scmp.eq.s32.totalorder %s20, 2
      %p113 = por %p111, %p112
      %p114 = scmp.ne.s32.totalorder %s105, %s106
      %p115 = scmp.eq.s32.totalorder %s20, 0
      %p116 = por %p114, %p115
      %p117 = scmp.ne.s32.totalorder %s105, %s106
      %p118 = scmp.eq.s32.totalorder %s21, 2
      %p119 = por %p117, %p118
      %p121 = scmp.ne.s32.totalorder %s106, %s120
      %p122 = scmp.eq.s32.totalorder %s21, 0
      %p123 = por %p121, %p122
      %s125 = sadd.s32 %s124, 1
      %p128 = scmp.eq.s32.totalorder %s15, 2
      %p129 = scmp.ne.s32.totalorder %s124, %s126
      %p130 = scmp.eq.s32.totalorder %s15, 0
      %p131 = por %p129, %p130
      %p132 = scmp.ne.s32.totalorder %s124, %s126
      %p133 = scmp.eq.s32.totalorder %s20, 2
      %p134 = por %p132, %p133
      %p135 = scmp.ne.s32.totalorder %s126, %s127
      %p136 = scmp.eq.s32.totalorder %s20, 0
      %p137 = por %p135, %p136
      %p138 = scmp.ne.s32.totalorder %s126, %s127
      %p139 = scmp.eq.s32.totalorder %s21, 2
      %p140 = por %p138, %p139
      %p142 = scmp.ne.s32.totalorder %s127, %s141
      %p143 = scmp.eq.s32.totalorder %s21, 0
      %p144 = por %p142, %p143
      %s146 = sadd.s32 %s145, 1
      %p149 = scmp.eq.s32.totalorder %s15, 2
      %p150 = scmp.ne.s32.totalorder %s145, %s147
      %p151 = scmp.eq.s32.totalorder %s15, 0
      %p152 = por %p150, %p151
      %p153 = scmp.ne.s32.totalorder %s145, %s147
      %p154 = scmp.eq.s32.totalorder %s20, 2
      %p155 = por %p153, %p154
      %p156 = scmp.ne.s32.totalorder %s147, %s148
      %p157 = scmp.eq.s32.totalorder %s20, 0
      %p158 = por %p156, %p157
      %p159 = scmp.ne.s32.totalorder %s147, %s148
      %p160 = scmp.eq.s32.totalorder %s21, 2
      %p161 = por %p159, %p160
      %p163 = scmp.ne.s32.totalorder %s148, %s162
      %p164 = scmp.eq.s32.totalorder %s21, 0
      %p165 = por %p163, %p164
      %s167 = sadd.s32 %s166, 1
      %p170 = scmp.eq.s32.totalorder %s15, 2
      %p171 = scmp.ne.s32.totalorder %s166, %s168
      %p172 = scmp.eq.s32.totalorder %s15, 0
      %p173 = por %p171, %p172
      %p174 = scmp.ne.s32.totalorder %s166, %s168
      %p175 = scmp.eq.s32.totalorder %s20, 2
      %p176 = por %p174, %p175
      %p177 = scmp.ne.s32.totalorder %s168, %s169
      %p178 = scmp.eq.s32.totalorder %s20, 0
      %p179 = por %p177, %p178
      %p180 = scmp.ne.s32.totalorder %s168, %s169
      %p181 = scmp.eq.s32.totalorder %s21, 2
      %p182 = por %p180, %p181
      %p184 = scmp.ne.s32.totalorder %s169, %s183
      %p185 = scmp.eq.s32.totalorder %s21, 0
      %p186 = por %p184, %p185
      %s187 = ssub.s32 %s23, %s30
      %p188 = scmp.eq.s32.totalorder %s187, 0
      %s190 = sadd.s32 %s189, 1
      %s191 = scalar_select %p188, %s189, %s190
      %p194 = pneg %p188
      %p195 = scmp.eq.s32.totalorder %s15, 2
      %p196 = por %p194, %p195
      %p197 = scmp.ne.s32.totalorder %s189, %s192
      %p198 = scmp.eq.s32.totalorder %s15, 0
      %p199 = por %p197, %p198
      %p200 = scmp.ne.s32.totalorder %s189, %s192
      %p201 = scmp.eq.s32.totalorder %s20, 2
      %p202 = por %p200, %p201
      %p203 = scmp.ne.s32.totalorder %s192, %s193
      %p204 = scmp.eq.s32.totalorder %s20, 0
      %p205 = por %p203, %p204
      %p206 = scmp.ne.s32.totalorder %s192, %s193
      %p207 = scmp.eq.s32.totalorder %s21, 2
      %p208 = por %p206, %p207
      %p210 = scmp.ne.s32.totalorder %s193, %s209
      %p211 = scmp.eq.s32.totalorder %s21, 0
      %p212 = por %p210, %p211
      %p213 = scmp.le.s32.totalorder 1, %s15
      %p214 = scmp.lt.s32.totalorder %s15, 4
      %p215 = pnand %p213, %p214
      %p216 = pneg %p215
      // Predicated region
      $region9: #{tpu_custom_call.1} parent=5 // pred_check
        _
      $region10: #{tpu_custom_call.1} parent=5 // pred_check_branch
        %218 = sbr.rel (%p215) target = $region12
      $region11: #{tpu_custom_call.1} parent=5 // pred_region
        %s219 = ssub.s32 %s15, 1
        // Predicated region
        $region13: #{tpu_custom_call.1} parent=11 // pred_check
          %p220 = pneg %p53
        $region14: #{tpu_custom_call.1} parent=11 // pred_check_branch
          %222 = sbr.rel (%p220) target = $region16
        $region15: #{tpu_custom_call.1} parent=11 // pred_region
          %s223 = smul.u32 2, %s25
          %p224 = scmp.lt.s32.totalorder %s223, 1
          %s225 = scalar_select %p224, %s223, 1
          %s226 = smul.addr %s225, 2
          %s227 = smul.addr %s226, 4
          %s228 = scalar_lea.vmem %s0, %s227
          %s229 = smul.u32 2, %s25
        $region16: #{tpu_custom_call.1} parent=11 // pred_fallthru
          _
        // Predicated region
        $region17: #{tpu_custom_call.1} parent=11 // pred_check
          %p230 = pneg %p74
        $region18: #{tpu_custom_call.1} parent=11 // pred_check_branch
          %232 = sbr.rel (%p230) target = $region20
        $region19: #{tpu_custom_call.1} parent=11 // pred_region
          _
        $region20: #{tpu_custom_call.1} parent=11 // pred_fallthru
          _
        // Predicated region
        $region21: #{tpu_custom_call.1} parent=11 // pred_check
          %p233 = pneg %p95
        $region22: #{tpu_custom_call.1} parent=11 // pred_check_branch
          %235 = sbr.rel (%p233) target = $region24
        $region23: #{tpu_custom_call.1} parent=11 // pred_region
          _
        $region24: #{tpu_custom_call.1} parent=11 // pred_fallthru
          _
        // Predicated region
        $region25: #{tpu_custom_call.1} parent=11 // pred_check
          %p236 = pneg %p116
        $region26: #{tpu_custom_call.1} parent=11 // pred_check_branch
          %238 = sbr.rel (%p236) target = $region28
        $region27: #{tpu_custom_call.1} parent=11 // pred_region
          _
        $region28: #{tpu_custom_call.1} parent=11 // pred_fallthru
          _
        // Predicated region
        $region29: #{tpu_custom_call.1} parent=11 // pred_check
          %p239 = pneg %p137
        $region30: #{tpu_custom_call.1} parent=11 // pred_check_branch
          %241 = sbr.rel (%p239) target = $region32
        $region31: #{tpu_custom_call.1} parent=11 // pred_region
          %s243 = ssub.s32 1536, 1536
          %244 = vsyncadd [#allocation8], %s243
          %s245 = sshll.u32 [#allocation7], 4
          %s246 = int_to_ptr.vmem [resolvable:$true] %s245
          %251 = dma.hbm_to_vmem [thread:$0]  %s4, 1536, %s246, [#allocation8], 64, 64, 4
        $region32: #{tpu_custom_call.1} parent=11 // pred_fallthru
          _
        // Predicated region
        $region33: #{tpu_custom_call.1} parent=11 // pred_check
          %p252 = pneg %p158
        $region34: #{tpu_custom_call.1} parent=11 // pred_check_branch
          %254 = sbr.rel (%p252) target = $region36
        $region35: #{tpu_custom_call.1} parent=11 // pred_region
          _
        $region36: #{tpu_custom_call.1} parent=11 // pred_fallthru
          _
        // Predicated region
        $region37: #{tpu_custom_call.1} parent=11 // pred_check
          %p255 = pneg %p179
        $region38: #{tpu_custom_call.1} parent=11 // pred_check_branch
          %257 = sbr.rel (%p255) target = $region40
        $region39: #{tpu_custom_call.1} parent=11 // pred_region
          _
        $region40: #{tpu_custom_call.1} parent=11 // pred_fallthru
          _
      $region12: #{tpu_custom_call.1} parent=5 // pred_fallthru
        _
      %p258 = scmp.lt.s32.totalorder %s15, 3
      // Predicated region
      $region41: #{tpu_custom_call.1} parent=5 // pred_check
        %p259 = pneg %p258
      $region42: #{tpu_custom_call.1} parent=5 // pred_check_branch
        %261 = sbr.rel (%p259) target = $region44
      $region43: #{tpu_custom_call.1} parent=5 // pred_region
        _
      $region44: #{tpu_custom_call.1} parent=5 // pred_fallthru
        _
      %p262 = scmp.le.s32.totalorder 1, %s15
      %p263 = scmp.lt.s32.totalorder %s15, 4
      %p264 = pnand %p262, %p263
      %p265 = pneg %p264
      // Predicated region
      $region45: #{tpu_custom_call.1} parent=5 // pred_check
        _
      $region46: #{tpu_custom_call.1} parent=5 // pred_check_branch
        %267 = sbr.rel (%p264) target = $region48
      $region47: #{tpu_custom_call.1} parent=5 // pred_region
        %s268 = ssub.s32 %s15, 1
        // Predicated region
        $region49: #{tpu_custom_call.1} parent=47 // pred_check
          %p269 = pneg %p137
        $region50: #{tpu_custom_call.1} parent=47 // pred_check_branch
          %271 = sbr.rel (%p269) target = $region52
        $region51: #{tpu_custom_call.1} parent=47 // pred_region
          %272 = dma.done [#allocation8], 1536
        $region52: #{tpu_custom_call.1} parent=47 // pred_fallthru
          _
        %s273 = smul.u32 2, %s25
        %p274 = scmp.lt.s32.totalorder %s273, 1
        %s275 = scalar_select %p274, %s273, 1
        %s276 = smul.addr %s275, 2
        %s277 = smul.addr %s276, 4
        %s278 = scalar_lea.vmem %s0, %s277
        %p279 = pneg %p53
        %p280 = pneg %p50
        %p281 = pneg %p74
        %p282 = pneg %p71
        %p283 = pneg %p95
        %p284 = pneg %p92
        %p285 = pneg %p116
        %p286 = pneg %p113
        %p287 = pneg %p137
        %p288 = pneg %p134
        %p289 = pneg %p158
        %p290 = pneg %p155
        %p291 = pneg %p179
        %p292 = pneg %p176
        %p293 = pneg %p205
        %p294 = pneg %p202
        %s295 = smul.u32 2, %s25
        %p296 = scmp.lt.s32.totalorder %s295, 1
        %s297 = scalar_select %p296, %s295, 1
        %s298 = smul.addr %s297, 2
        %s299 = smul.addr %s298, 4
        %s300 = scalar_lea.vmem %s0, %s299
        %s301 = smul.u32 2, %s25
        %p303 = scmp.eq.s32.totalorder %s24, 0
        %p304 = scmp.eq.s32.totalorder %s25, 0
        %p305 = pnand %p303, %p304
        %p306 = pneg %p305
        // Predicated region
        $region53: #{tpu_custom_call.1} parent=47 // pred_check
          _
        $region54: #{tpu_custom_call.1} parent=47 // pred_check_branch
          %308 = sbr.rel (%p305) target = $region56
        $region55: #{tpu_custom_call.1} parent=47 // pred_region
          %vm309 = vcmask 516096
          %310 = vst.msk [vmem:[#allocation2] sm:$0x1] %vm309, 0.0
          %311 = vst.msk [vmem:[#allocation3] sm:$0x1] %vm309, 0.0
          %312 = vst [vmem:[#allocation4] sm:$0x1] 0.0
          %313 = vst [vmem:[#allocation5] sm:$0x1] 0.0
        $region56: #{tpu_custom_call.1} parent=47 // pred_fallthru
          _
        // Predicated region
        $region57: #{tpu_custom_call.1} parent=47 // pred_check
          %p314 = pneg %p303
        $region58: #{tpu_custom_call.1} parent=47 // pred_check_branch
          %316 = sbr.rel (%p314) target = $region60
        $region59: #{tpu_custom_call.1} parent=47 // pred_region
          %v317 = vld [vmem:[%s300] sm:$0xf]
          %v318 = vld [vmem:[%s300 + $0x4] sm:$0x1]
          %v319 = vld [vmem:[%s300 + $0x8] sm:$0xf]
          %v320 = vld [vmem:[%s300 + $0xc] sm:$0x1]
          %v321 = vld [vmem:[%s1] sm:$0xf]
          %v322 = vld [vmem:[%s1 + $0x4] sm:$0x3]
          %v328 = vunpack.c.l.s4 1966171168
          %v329 = vunpack.c.0.s8 %v328
          %v330 = vlaneseq
          %v331 = vshrl.u32 %v330, 7
          %v332 = vsub.s32 %v329, %v331
          %v333 = vrot.slane %v317, %v332
          %v334 = vcombine.high %v333, %v333
          %v336 = vunpack.c.l.s4 1966171168
          %v337 = vunpack.c.0.s8 %v336
          %v338 = vlaneseq
          %v339 = vshrl.u32 %v338, 7
          %v340 = vsub.s32 %v337, %v339
          %v341 = vrot.slane %v333, %v340
          %v343 = vunpack.c.l.s4 1966171168
          %v344 = vunpack.c.0.s8 %v343
          %v345 = vlaneseq
          %v346 = vshrl.u32 %v345, 7
          %v347 = vsub.s32 %v344, %v346
          %v348 = vrot.slane %v334, %v347
          %v349 = vcombine.high %v341, %v341
          %v350 = vcombine.high %v348, %v348
          %v352 = vunpack.c.l.s4 1966171168
          %v353 = vunpack.c.0.s8 %v352
          %v354 = vlaneseq
          %v355 = vshrl.u32 %v354, 7
          %v356 = vsub.s32 %v353, %v355
          %v357 = vrot.slane %v318, %v356
          %v359 = vunpack.c.l.s4 1966171168
          %v360 = vunpack.c.0.s8 %v359
          %v361 = vlaneseq
          %v362 = vshrl.u32 %v361, 7
          %v363 = vsub.s32 %v360, %v362
          %v364 = vrot.slane %v357, %v363
          %v366 = vunpack.c.l.s4 1966171168
          %v367 = vunpack.c.0.s8 %v366
          %v368 = vlaneseq
          %v369 = vshrl.u32 %v368, 7
          %v370 = vsub.s32 %v367, %v369
          %v371 = vrot.slane %v319, %v370
          %v372 = vcombine.high %v371, %v371
          %v374 = vunpack.c.l.s4 1966171168
          %v375 = vunpack.c.0.s8 %v374
          %v376 = vlaneseq
          %v377 = vshrl.u32 %v376, 7
          %v378 = vsub.s32 %v375, %v377
          %v379 = vrot.slane %v371, %v378
          %v381 = vunpack.c.l.s4 1966171168
          %v382 = vunpack.c.0.s8 %v381
          %v383 = vlaneseq
          %v384 = vshrl.u32 %v383, 7
          %v385 = vsub.s32 %v382, %v384
          %v386 = vrot.slane %v372, %v385
          %v387 = vcombine.high %v379, %v379
          %v388 = vcombine.high %v386, %v386
          %v390 = vunpack.c.l.s4 1966171168
          %v391 = vunpack.c.0.s8 %v390
          %v392 = vlaneseq
          %v393 = vshrl.u32 %v392, 7
          %v394 = vsub.s32 %v391, %v393
          %v395 = vrot.slane %v320, %v394
          %v397 = vunpack.c.l.s4 1966171168
          %v398 = vunpack.c.0.s8 %v397
          %v399 = vlaneseq
          %v400 = vshrl.u32 %v399, 7
          %v401 = vsub.s32 %v398, %v400
          %v402 = vrot.slane %v395, %v401
          %v403 = vcombine.low %v341, %v348
          %v404 = vcombine.low %v349, %v350
          %v405 = vcombine.low %v364, %v379
          %v406 = vcombine.low %v386, %v387
          %v408 = vunpack.c.l.s4 1966171168
          %v409 = vunpack.c.0.s8 %v408
          %v410 = vlaneseq
          %v411 = vshrl.u32 %v410, 7
          %v412 = vsub.s32 %v409, %v411
          %v413 = vrot.slane %v403, %v412
          %v415 = vunpack.c.l.s4 1966171168
          %v416 = vunpack.c.0.s8 %v415
          %v417 = vlaneseq
          %v418 = vshrl.u32 %v417, 7
          %v419 = vsub.s32 %v416, %v418
          %v420 = vrot.slane %v404, %v419
          %v422 = vunpack.c.l.s4 1966171168
          %v423 = vunpack.c.0.s8 %v422
          %v424 = vlaneseq
          %v425 = vshrl.u32 %v424, 7
          %v426 = vsub.s32 %v423, %v425
          %v427 = vrot.slane %v405, %v426
          %v429 = vunpack.c.l.s4 1966171168
          %v430 = vunpack.c.0.s8 %v429
          %v431 = vlaneseq
          %v432 = vshrl.u32 %v431, 7
          %v433 = vsub.s32 %v430, %v432
          %v434 = vrot.slane %v406, %v433
          %v435 = vcombine.low %v413, %v420
          %v436 = vcombine.low %v427, %v434
          %v438 = vunpack.c.l.s4 1966171168
          %v439 = vunpack.c.0.s8 %v438
          %v440 = vlaneseq
          %v441 = vshrl.u32 %v440, 7
          %v442 = vsub.s32 %v439, %v441
          %v443 = vrot.slane %v435, %v442
          %v445 = vunpack.c.l.s4 1966171168
          %v446 = vunpack.c.0.s8 %v445
          %v447 = vlaneseq
          %v448 = vshrl.u32 %v447, 7
          %v449 = vsub.s32 %v446, %v448
          %v450 = vrot.slane %v436, %v449
          %v451 = vcombine.low %v443, %v450
          %v452 = vcombine.low %v388, %v402
          %v454 = vunpack.c.l.s4 1966171168
          %v455 = vunpack.c.0.s8 %v454
          %v456 = vlaneseq
          %v457 = vshrl.u32 %v456, 7
          %v458 = vsub.s32 %v455, %v457
          %v459 = vrot.slane %v452, %v458
          %v461 = vunpack.c.l.s4 1966171168
          %v462 = vunpack.c.0.s8 %v461
          %v463 = vlaneseq
          %v464 = vshrl.u32 %v463, 7
          %v465 = vsub.s32 %v462, %v464
          %v466 = vrot.slane %v459, %v465
          %v469 = vunpack.c.l.b16 %v321
          %v470 = vunpack.c.l.b16 %v322
          %v471 = vpack.c.b16 %v470, %v469
          %vm472 = vcmask 97280
          %v474 = vsel %vm472, %v451, 0
          %v477 = vsel %vm472, %v466, 0
          %vm479 = vcmask 1045504
          %v481 = vsel %vm479, %v471, 0
          %483 = vmatprep.subr.bf16.mxu0 0
          %484 = vmatpush1.bf16.msra.mxu0 %v481
          %485 = vmatprep.subr.bf16.mxu0 0
          %486 = vmatpush1.bf16.msra.mxu0 0
          %487 = vmatprep.subr.bf16.mxu0 0
          %488 = vmatpush1.bf16.msra.mxu0 0
          %489 = vmatprep.subr.bf16.mxu0 0
          %490 = vmatpush1.bf16.msra.mxu0 0
          %491 = vmatprep.subr.bf16.mxu0 0
          %492 = vmatpush1.bf16.msra.mxu0 0
          %493 = vmatprep.subr.bf16.mxu0 0
          %494 = vmatpush1.bf16.msra.mxu0 0
          %495 = vmatprep.subr.bf16.mxu0 0
          %496 = vmatpush1.bf16.msra.mxu0 0
          %497 = vmatprep.subr.bf16.mxu0 0
          %498 = vmatpush1.bf16.msra.mxu0 0
          %499 = vmatprep.subr.bf16.mxu0 0
          %500 = vmatpush1.bf16.msra.mxu0 0
          %501 = vmatprep.subr.bf16.mxu0 0
          %502 = vmatpush1.bf16.msra.mxu0 0
          %503 = vmatprep.subr.bf16.mxu0 0
          %504 = vmatpush1.bf16.msra.mxu0 0
          %505 = vmatprep.subr.bf16.mxu0 0
          %506 = vmatpush1.bf16.msra.mxu0 0
          %507 = vmatprep.subr.bf16.mxu0 0
          %508 = vmatpush1.bf16.msra.mxu0 0
          %509 = vmatprep.subr.bf16.mxu0 0
          %510 = vmatpush1.bf16.msra.mxu0 0
          %511 = vmatprep.subr.bf16.mxu0 0
          %512 = vmatpush1.bf16.msra.mxu0 0
          %513 = vmatprep.subr.bf16.mxu0 0
          %514 = vmatpush1.bf16.msra.mxu0 0
          %515 = vmatprep.mubr.bf16.mxu0 0
          %516 = vmatmul.mubr.bf16.gmra.mrb[0].mxu0 %v474
          %v517 = vpop.f32.mrb[0].mxu0
          %v518 = vadd.f32 0.0, %v517
          %v519 = vpop.f32.mrb[0].mxu0
          %v520 = vpop.f32.mrb[0].mxu0
          %v521 = vadd.f32 0.0, %v520
          %v522 = vpop.f32.mrb[0].mxu0
          %523 = vmatprep.mubr.bf16.mxu0 0
          %524 = vmatmul.mubr.bf16.gmra.mrb[0].mxu0 %v477
          %v525 = vpop.f32.mrb[0].mxu0
          %v526 = vadd.f32 0.0, %v525
          %v527 = vpop.f32.mrb[0].mxu0
          %v528 = vpop.f32.mrb[0].mxu0
          %v529 = vpop.f32.mrb[0].mxu0
          %530 = vdwg.mxu0
          %v534 = vcombine.high %v518, %v518
          %v536 = vunpack.c.l.s4 1983009808
          %v537 = vunpack.c.0.s8 %v536
          %v538 = vlaneseq
          %v539 = vshrl.u32 %v538, 7
          %v540 = vsub.s32 %v537, %v539
          %v541 = vrot.slane %v518, %v540
          %v543 = vunpack.c.l.s4 1983009808
          %v544 = vunpack.c.0.s8 %v543
          %v545 = vlaneseq
          %v546 = vshrl.u32 %v545, 7
          %v547 = vsub.s32 %v544, %v546
          %v548 = vrot.slane %v534, %v547
          %v549 = vcombine.high %v541, %v541
          %v550 = vcombine.high %v548, %v548
          %v551 = vcombine.high %v521, %v521
          %v553 = vunpack.c.l.s4 1983009808
          %v554 = vunpack.c.0.s8 %v553
          %v555 = vlaneseq
          %v556 = vshrl.u32 %v555, 7
          %v557 = vsub.s32 %v554, %v556
          %v558 = vrot.slane %v521, %v557
          %v560 = vunpack.c.l.s4 1983009808
          %v561 = vunpack.c.0.s8 %v560
          %v562 = vlaneseq
          %v563 = vshrl.u32 %v562, 7
          %v564 = vsub.s32 %v561, %v563
          %v565 = vrot.slane %v551, %v564
          %v566 = vcombine.high %v558, %v558
          %v567 = vcombine.high %v565, %v565
          %v569 = vunpack.c.l.s4 1983009808
          %v570 = vunpack.c.0.s8 %v569
          %v571 = vlaneseq
          %v572 = vshrl.u32 %v571, 7
          %v573 = vsub.s32 %v570, %v572
          %v574 = vrot.slane %v526, %v573
          %v575 = vcombine.high %v574, %v574
          %v586 = vld [vmem:[#allocation2] sm:$0x1]
          %v587 = vcombine.low %v541, %v549
          %v588 = vcombine.low %v548, %v550
          %v590 = vunpack.c.l.s4 1983009808
          %v591 = vunpack.c.0.s8 %v590
          %v592 = vlaneseq
          %v593 = vshrl.u32 %v592, 7
          %v594 = vsub.s32 %v591, %v593
          %v595 = vrot.slane %v587, %v594
          %v597 = vunpack.c.l.s4 1983009808
          %v598 = vunpack.c.0.s8 %v597
          %v599 = vlaneseq
          %v600 = vshrl.u32 %v599, 7
          %v601 = vsub.s32 %v598, %v600
          %v602 = vrot.slane %v588, %v601
          %v603 = vcombine.low %v595, %v602
          %v605 = vunpack.c.l.s4 1983009808
          %v606 = vunpack.c.0.s8 %v605
          %v607 = vlaneseq
          %v608 = vshrl.u32 %v607, 7
          %v609 = vsub.s32 %v606, %v608
          %v610 = vrot.slane %v558, %v609
          %v611 = vcombine.low %v566, %v565
          %v612 = vcombine.low %v567, %v574
          %v614 = vunpack.c.l.s4 1983009808
          %v615 = vunpack.c.0.s8 %v614
          %v616 = vlaneseq
          %v617 = vshrl.u32 %v616, 7
          %v618 = vsub.s32 %v615, %v617
          %v619 = vrot.slane %v611, %v618
          %v621 = vunpack.c.l.s4 1983009808
          %v622 = vunpack.c.0.s8 %v621
          %v623 = vlaneseq
          %v624 = vshrl.u32 %v623, 7
          %v625 = vsub.s32 %v622, %v624
          %v626 = vrot.slane %v612, %v625
          %v627 = vcombine.low %v619, %v626
          %v629 = vunpack.c.l.s4 1983009808
          %v630 = vunpack.c.0.s8 %v629
          %v631 = vlaneseq
          %v632 = vshrl.u32 %v631, 7
          %v633 = vsub.s32 %v630, %v632
          %v634 = vrot.slane %v575, %v633
          %vm639 = vcmask 523264
          %v640 = vsel %vm639, %v603, 0.0
          %v641 = vsel %vm639, %v627, 0.0
          %v642 = vadd.f32 %v640, %v641
          %vm643 = vcmask 517120
          %v644 = vsel %vm643, %v610, 0.0
          %v645 = vsel %vm643, %v634, 0.0
          %v646 = vadd.f32 %v644, %v645
          %v647 = vsel %vm639, %v642, 0.0
          %v648 = vsel %vm643, %v646, 0.0
          %v649 = vadd.f32 %v647, %v648
          %v650 = vrot.slane %v649, 4
          %v651 = vadd.f32 %v649, %v650
          %v652 = vrot.slane %v651, 2
          %v653 = vadd.f32 %v651, %v652
          %v654 = vrot.slane %v653, 1
          %v655 = vadd.f32 %v653, %v654
          %v656 = vadd.f32 %v586, %v655
          %vm657 = vcmask 516096
          %658 = vst.msk [vmem:[#allocation2] sm:$0x1] %vm657, %v656
          %v659 = vld [vmem:[#allocation3] sm:$0x1]
          %v660 = vmul.f32 %v541, %v541
          %v661 = vmul.f32 %v549, %v549
          %v662 = vmul.f32 %v548, %v548
          %v663 = vmul.f32 %v550, %v550
          %v664 = vmul.f32 %v558, %v558
          %v665 = vmul.f32 %v566, %v566
          %v666 = vmul.f32 %v565, %v565
          %v667 = vmul.f32 %v567, %v567
          %v668 = vmul.f32 %v574, %v574
          %v669 = vmul.f32 %v575, %v575
          %v680 = vcombine.low %v660, %v661
          %v681 = vcombine.low %v662, %v663
          %v683 = vunpack.c.l.s4 1983009808
          %v684 = vunpack.c.0.s8 %v683
          %v685 = vlaneseq
          %v686 = vshrl.u32 %v685, 7
          %v687 = vsub.s32 %v684, %v686
          %v688 = vrot.slane %v680, %v687
          %v690 = vunpack.c.l.s4 1983009808
          %v691 = vunpack.c.0.s8 %v690
          %v692 = vlaneseq
          %v693 = vshrl.u32 %v692, 7
          %v694 = vsub.s32 %v691, %v693
          %v695 = vrot.slane %v681, %v694
          %v696 = vcombine.low %v688, %v695
          %v698 = vunpack.c.l.s4 1983009808
          %v699 = vunpack.c.0.s8 %v698
          %v700 = vlaneseq
          %v701 = vshrl.u32 %v700, 7
          %v702 = vsub.s32 %v699, %v701
          %v703 = vrot.slane %v664, %v702
          %v704 = vcombine.low %v665, %v666
          %v705 = vcombine.low %v667, %v668
          %v707 = vunpack.c.l.s4 1983009808
          %v708 = vunpack.c.0.s8 %v707
          %v709 = vlaneseq
          %v710 = vshrl.u32 %v709, 7
          %v711 = vsub.s32 %v708, %v710
          %v712 = vrot.slane %v704, %v711
          %v714 = vunpack.c.l.s4 1983009808
          %v715 = vunpack.c.0.s8 %v714
          %v716 = vlaneseq
          %v717 = vshrl.u32 %v716, 7
          %v718 = vsub.s32 %v715, %v717
          %v719 = vrot.slane %v705, %v718
          %v720 = vcombine.low %v712, %v719
          %v722 = vunpack.c.l.s4 1983009808
          %v723 = vunpack.c.0.s8 %v722
          %v724 = vlaneseq
          %v725 = vshrl.u32 %v724, 7
          %v726 = vsub.s32 %v723, %v725
          %v727 = vrot.slane %v669, %v726
          %v732 = vsel %vm639, %v696, 0.0
          %v733 = vsel %vm639, %v720, 0.0
          %v734 = vadd.f32 %v732, %v733
          %v735 = vsel %vm643, %v703, 0.0
          %v736 = vsel %vm643, %v727, 0.0
          %v737 = vadd.f32 %v735, %v736
          %v738 = vsel %vm639, %v734, 0.0
          %v739 = vsel %vm643, %v737, 0.0
          %v740 = vadd.f32 %v738, %v739
          %v741 = vrot.slane %v740, 4
          %v742 = vadd.f32 %v740, %v741
          %v743 = vrot.slane %v742, 2
          %v744 = vadd.f32 %v742, %v743
          %v745 = vrot.slane %v744, 1
          %v746 = vadd.f32 %v744, %v745
          %v747 = vadd.f32 %v659, %v746
          %748 = vst.msk [vmem:[#allocation3] sm:$0x1] %vm657, %v747
        $region60: #{tpu_custom_call.1} parent=47 // pred_fallthru
          _
        %p749 = scmp.eq.s32.totalorder %s24, 1
        // Predicated region
        $region61: #{tpu_custom_call.1} parent=47 // pred_check
          %p750 = pneg %p749
        $region62: #{tpu_custom_call.1} parent=47 // pred_check_branch
          %752 = sbr.rel (%p750) target = $region64
        $region63: #{tpu_custom_call.1} parent=47 // pred_region
          %v753 = vld [vmem:[%s300] sm:$0xf]
          %v754 = vld [vmem:[%s300 + $0x4] sm:$0x1]
          %v755 = vld [vmem:[%s300 + $0x8] sm:$0xf]
          %v756 = vld [vmem:[%s300 + $0xc] sm:$0x1]
          %v757 = vld [vmem:[%s1] sm:$0xf]
          %v758 = vld [vmem:[%s1 + $0x4] sm:$0x3]
          %v764 = vunpack.c.l.s4 1966171168
          %v765 = vunpack.c.0.s8 %v764
          %v766 = vlaneseq
          %v767 = vshrl.u32 %v766, 7
          %v768 = vsub.s32 %v765, %v767
          %v769 = vrot.slane %v753, %v768
          %v770 = vcombine.high %v769, %v769
          %v772 = vunpack.c.l.s4 1966171168
          %v773 = vunpack.c.0.s8 %v772
          %v774 = vlaneseq
          %v775 = vshrl.u32 %v774, 7
          %v776 = vsub.s32 %v773, %v775
          %v777 = vrot.slane %v769, %v776
          %v779 = vunpack.c.l.s4 1966171168
          %v780 = vunpack.c.0.s8 %v779
          %v781 = vlaneseq
          %v782 = vshrl.u32 %v781, 7
          %v783 = vsub.s32 %v780, %v782
          %v784 = vrot.slane %v770, %v783
          %v785 = vcombine.high %v777, %v777
          %v786 = vcombine.high %v784, %v784
          %v788 = vunpack.c.l.s4 1966171168
          %v789 = vunpack.c.0.s8 %v788
          %v790 = vlaneseq
          %v791 = vshrl.u32 %v790, 7
          %v792 = vsub.s32 %v789, %v791
          %v793 = vrot.slane %v754, %v792
          %v795 = vunpack.c.l.s4 1966171168
          %v796 = vunpack.c.0.s8 %v795
          %v797 = vlaneseq
          %v798 = vshrl.u32 %v797, 7
          %v799 = vsub.s32 %v796, %v798
          %v800 = vrot.slane %v793, %v799
          %v802 = vunpack.c.l.s4 1966171168
          %v803 = vunpack.c.0.s8 %v802
          %v804 = vlaneseq
          %v805 = vshrl.u32 %v804, 7
          %v806 = vsub.s32 %v803, %v805
          %v807 = vrot.slane %v755, %v806
          %v808 = vcombine.high %v807, %v807
          %v810 = vunpack.c.l.s4 1966171168
          %v811 = vunpack.c.0.s8 %v810
          %v812 = vlaneseq
          %v813 = vshrl.u32 %v812, 7
          %v814 = vsub.s32 %v811, %v813
          %v815 = vrot.slane %v807, %v814
          %v817 = vunpack.c.l.s4 1966171168
          %v818 = vunpack.c.0.s8 %v817
          %v819 = vlaneseq
          %v820 = vshrl.u32 %v819, 7
          %v821 = vsub.s32 %v818, %v820
          %v822 = vrot.slane %v808, %v821
          %v823 = vcombine.high %v815, %v815
          %v824 = vcombine.high %v822, %v822
          %v826 = vunpack.c.l.s4 1966171168
          %v827 = vunpack.c.0.s8 %v826
          %v828 = vlaneseq
          %v829 = vshrl.u32 %v828, 7
          %v830 = vsub.s32 %v827, %v829
          %v831 = vrot.slane %v756, %v830
          %v833 = vunpack.c.l.s4 1966171168
          %v834 = vunpack.c.0.s8 %v833
          %v835 = vlaneseq
          %v836 = vshrl.u32 %v835, 7
          %v837 = vsub.s32 %v834, %v836
          %v838 = vrot.slane %v831, %v837
          %v839 = vcombine.low %v777, %v784
          %v840 = vcombine.low %v785, %v786
          %v841 = vcombine.low %v800, %v815
          %v842 = vcombine.low %v822, %v823
          %v844 = vunpack.c.l.s4 1966171168
          %v845 = vunpack.c.0.s8 %v844
          %v846 = vlaneseq
          %v847 = vshrl.u32 %v846, 7
          %v848 = vsub.s32 %v845, %v847
          %v849 = vrot.slane %v839, %v848
          %v851 = vunpack.c.l.s4 1966171168
          %v852 = vunpack.c.0.s8 %v851
          %v853 = vlaneseq
          %v854 = vshrl.u32 %v853, 7
          %v855 = vsub.s32 %v852, %v854
          %v856 = vrot.slane %v840, %v855
          %v858 = vunpack.c.l.s4 1966171168
          %v859 = vunpack.c.0.s8 %v858
          %v860 = vlaneseq
          %v861 = vshrl.u32 %v860, 7
          %v862 = vsub.s32 %v859, %v861
          %v863 = vrot.slane %v841, %v862
          %v865 = vunpack.c.l.s4 1966171168
          %v866 = vunpack.c.0.s8 %v865
          %v867 = vlaneseq
          %v868 = vshrl.u32 %v867, 7
          %v869 = vsub.s32 %v866, %v868
          %v870 = vrot.slane %v842, %v869
          %v871 = vcombine.low %v849, %v856
          %v872 = vcombine.low %v863, %v870
          %v874 = vunpack.c.l.s4 1966171168
          %v875 = vunpack.c.0.s8 %v874
          %v876 = vlaneseq
          %v877 = vshrl.u32 %v876, 7
          %v878 = vsub.s32 %v875, %v877
          %v879 = vrot.slane %v871, %v878
          %v881 = vunpack.c.l.s4 1966171168
          %v882 = vunpack.c.0.s8 %v881
          %v883 = vlaneseq
          %v884 = vshrl.u32 %v883, 7
          %v885 = vsub.s32 %v882, %v884
          %v886 = vrot.slane %v872, %v885
          %v887 = vcombine.low %v879, %v886
          %v888 = vcombine.low %v824, %v838
          %v890 = vunpack.c.l.s4 1966171168
          %v891 = vunpack.c.0.s8 %v890
          %v892 = vlaneseq
          %v893 = vshrl.u32 %v892, 7
          %v894 = vsub.s32 %v891, %v893
          %v895 = vrot.slane %v888, %v894
          %v897 = vunpack.c.l.s4 1966171168
          %v898 = vunpack.c.0.s8 %v897
          %v899 = vlaneseq
          %v900 = vshrl.u32 %v899, 7
          %v901 = vsub.s32 %v898, %v900
          %v902 = vrot.slane %v895, %v901
          %v905 = vunpack.c.l.b16 %v757
          %v906 = vunpack.c.l.b16 %v758
          %v907 = vpack.c.b16 %v906, %v905
          %vm908 = vcmask 97280
          %v910 = vsel %vm908, %v887, 0
          %v913 = vsel %vm908, %v902, 0
          %vm915 = vcmask 1045504
          %v917 = vsel %vm915, %v907, 0
          %919 = vmatprep.subr.bf16.mxu0 0
          %920 = vmatpush1.bf16.msra.mxu0 %v917
          %921 = vmatprep.subr.bf16.mxu0 0
          %922 = vmatpush1.bf16.msra.mxu0 0
          %923 = vmatprep.subr.bf16.mxu0 0
          %924 = vmatpush1.bf16.msra.mxu0 0
          %925 = vmatprep.subr.bf16.mxu0 0
          %926 = vmatpush1.bf16.msra.mxu0 0
          %927 = vmatprep.subr.bf16.mxu0 0
          %928 = vmatpush1.bf16.msra.mxu0 0
          %929 = vmatprep.subr.bf16.mxu0 0
          %930 = vmatpush1.bf16.msra.mxu0 0
          %931 = vmatprep.subr.bf16.mxu0 0
          %932 = vmatpush1.bf16.msra.mxu0 0
          %933 = vmatprep.subr.bf16.mxu0 0
          %934 = vmatpush1.bf16.msra.mxu0 0
          %935 = vmatprep.subr.bf16.mxu0 0
          %936 = vmatpush1.bf16.msra.mxu0 0
          %937 = vmatprep.subr.bf16.mxu0 0
          %938 = vmatpush1.bf16.msra.mxu0 0
          %939 = vmatprep.subr.bf16.mxu0 0
          %940 = vmatpush1.bf16.msra.mxu0 0
          %941 = vmatprep.subr.bf16.mxu0 0
          %942 = vmatpush1.bf16.msra.mxu0 0
          %943 = vmatprep.subr.bf16.mxu0 0
          %944 = vmatpush1.bf16.msra.mxu0 0
          %945 = vmatprep.subr.bf16.mxu0 0
          %946 = vmatpush1.bf16.msra.mxu0 0
          %947 = vmatprep.subr.bf16.mxu0 0
          %948 = vmatpush1.bf16.msra.mxu0 0
          %949 = vmatprep.subr.bf16.mxu0 0
          %950 = vmatpush1.bf16.msra.mxu0 0
          %951 = vmatprep.mubr.bf16.mxu0 0
          %952 = vmatmul.mubr.bf16.gmra.mrb[0].mxu0 %v910
          %v953 = vpop.f32.mrb[0].mxu0
          %v954 = vadd.f32 0.0, %v953
          %v955 = vpop.f32.mrb[0].mxu0
          %v956 = vpop.f32.mrb[0].mxu0
          %v957 = vadd.f32 0.0, %v956
          %v958 = vpop.f32.mrb[0].mxu0
          %959 = vmatprep.mubr.bf16.mxu0 0
          %960 = vmatmul.mubr.bf16.gmra.mrb[0].mxu0 %v913
          %v961 = vpop.f32.mrb[0].mxu0
          %v962 = vadd.f32 0.0, %v961
          %v963 = vpop.f32.mrb[0].mxu0
          %v964 = vpop.f32.mrb[0].mxu0
          %v965 = vpop.f32.mrb[0].mxu0
          %966 = vdwg.mxu0
          %v970 = vcombine.high %v954, %v954
          %v972 = vunpack.c.l.s4 1983009808
          %v973 = vunpack.c.0.s8 %v972
          %v974 = vlaneseq
          %v975 = vshrl.u32 %v974, 7
          %v976 = vsub.s32 %v973, %v975
          %v977 = vrot.slane %v954, %v976
          %v979 = vunpack.c.l.s4 1983009808
          %v980 = vunpack.c.0.s8 %v979
          %v981 = vlaneseq
          %v982 = vshrl.u32 %v981, 7
          %v983 = vsub.s32 %v980, %v982
          %v984 = vrot.slane %v970, %v983
          %v985 = vcombine.high %v977, %v977
          %v986 = vcombine.high %v984, %v984
          %v987 = vcombine.high %v957, %v957
          %v989 = vunpack.c.l.s4 1983009808
          %v990 = vunpack.c.0.s8 %v989
          %v991 = vlaneseq
          %v992 = vshrl.u32 %v991, 7
          %v993 = vsub.s32 %v990, %v992
          %v994 = vrot.slane %v957, %v993
          %v996 = vunpack.c.l.s4 1983009808
          %v997 = vunpack.c.0.s8 %v996
          %v998 = vlaneseq
          %v999 = vshrl.u32 %v998, 7
          %v1000 = vsub.s32 %v997, %v999
          %v1001 = vrot.slane %v987, %v1000
          %v1002 = vcombine.high %v994, %v994
          %v1003 = vcombine.high %v1001, %v1001
          %v1005 = vunpack.c.l.s4 1983009808
          %v1006 = vunpack.c.0.s8 %v1005
          %v1007 = vlaneseq
          %v1008 = vshrl.u32 %v1007, 7
          %v1009 = vsub.s32 %v1006, %v1008
          %v1010 = vrot.slane %v962, %v1009
          %v1019 = vld [vmem:[#allocation2] sm:$0x1]
          %v1020 = vrcp.pop 20.0
          %v1021 = vmul.f32 %v1019, %v1020
          %v1022 = vld [vmem:[#allocation3] sm:$0x1]
          %v1023 = vmul.f32 %v1022, %v1020
          %v1024 = vmul.f32 %v1021, %v1021
          %v1025 = vsub.f32 %v1023, %v1024
          %v1026 = vmax.f32 %v1025, 0.0
          %v1027 = vadd.f32 %v1026, 1e-05
          %v1028 = vrsqrt.pop %v1027
          %v1029 = vld [vmem:[%s2] sm:$0x1]
          %v1030 = vmul.f32 %v1029, %v1028
          %v1031 = vld [vmem:[%s3] sm:$0x1]
          %v1032 = vmul.f32 %v1021, %v1030
          %v1033 = vsub.f32 %v1031, %v1032
          %v1035 = vlaneseq
          %v1036 = vshrl.u32 %v1035, 7
          %v1037 = vsub.s32 0, %v1036
          %v1038 = vrot.slane %v1030, %v1037
          %v1039 = vcombine.high %v1038, %v1038
          %v1041 = vunpack.c.l.s4 1983009808
          %v1042 = vunpack.c.0.s8 %v1041
          %v1043 = vlaneseq
          %v1044 = vshrl.u32 %v1043, 7
          %v1045 = vsub.s32 %v1042, %v1044
          %v1046 = vrot.slane %v1038, %v1045
          %v1048 = vunpack.c.l.s4 1983009808
          %v1049 = vunpack.c.0.s8 %v1048
          %v1050 = vlaneseq
          %v1051 = vshrl.u32 %v1050, 7
          %v1052 = vsub.s32 %v1049, %v1051
          %v1053 = vrot.slane %v1039, %v1052
          %v1054 = vcombine.high %v1046, %v1046
          %v1055 = vcombine.high %v1053, %v1053
          %v1060 = vmul.f32 %v977, %v1046
          %v1061 = vmul.f32 %v985, %v1054
          %v1062 = vmul.f32 %v984, %v1053
          %v1063 = vmul.f32 %v986, %v1055
          %v1064 = vmul.f32 %v1002, %v1046
          %v1065 = vmul.f32 %v1001, %v1054
          %v1066 = vmul.f32 %v1003, %v1053
          %v1067 = vmul.f32 %v1010, %v1055
          %v1069 = vlaneseq
          %v1070 = vshrl.u32 %v1069, 7
          %v1071 = vsub.s32 0, %v1070
          %v1072 = vrot.slane %v1033, %v1071
          %v1073 = vcombine.high %v1072, %v1072
          %v1075 = vunpack.c.l.s4 1983009808
          %v1076 = vunpack.c.0.s8 %v1075
          %v1077 = vlaneseq
          %v1078 = vshrl.u32 %v1077, 7
          %v1079 = vsub.s32 %v1076, %v1078
          %v1080 = vrot.slane %v1072, %v1079
          %v1082 = vunpack.c.l.s4 1983009808
          %v1083 = vunpack.c.0.s8 %v1082
          %v1084 = vlaneseq
          %v1085 = vshrl.u32 %v1084, 7
          %v1086 = vsub.s32 %v1083, %v1085
          %v1087 = vrot.slane %v1073, %v1086
          %v1088 = vcombine.high %v1080, %v1080
          %v1089 = vcombine.high %v1087, %v1087
          %v1094 = vadd.f32 %v1060, %v1080
          %v1095 = vadd.f32 %v1061, %v1088
          %v1096 = vadd.f32 %v1062, %v1087
          %v1097 = vadd.f32 %v1063, %v1089
          %v1098 = vadd.f32 %v1064, %v1080
          %v1099 = vadd.f32 %v1065, %v1088
          %v1100 = vadd.f32 %v1066, %v1087
          %v1101 = vadd.f32 %v1067, %v1089
          %v1102 = vmax.f32 %v1094, 0.0
          %v1103 = vmax.f32 %v1095, 0.0
          %v1104 = vmax.f32 %v1096, 0.0
          %v1105 = vmax.f32 %v1097, 0.0
          %v1106 = vmax.f32 %v1098, 0.0
          %v1107 = vmax.f32 %v1099, 0.0
          %v1108 = vmax.f32 %v1100, 0.0
          %v1109 = vmax.f32 %v1101, 0.0
          %v1118 = vcombine.low %v1102, %v1103
          %v1119 = vcombine.low %v1104, %v1105
          %v1121 = vunpack.c.l.s4 1983009808
          %v1122 = vunpack.c.0.s8 %v1121
          %v1123 = vlaneseq
          %v1124 = vshrl.u32 %v1123, 7
          %v1125 = vsub.s32 %v1122, %v1124
          %v1126 = vrot.slane %v1118, %v1125
          %v1128 = vunpack.c.l.s4 1983009808
          %v1129 = vunpack.c.0.s8 %v1128
          %v1130 = vlaneseq
          %v1131 = vshrl.u32 %v1130, 7
          %v1132 = vsub.s32 %v1129, %v1131
          %v1133 = vrot.slane %v1119, %v1132
          %v1134 = vcombine.low %v1126, %v1133
          %v1135 = vcombine.low %v1106, %v1107
          %v1136 = vcombine.low %v1108, %v1109
          %v1138 = vunpack.c.l.s4 1983009808
          %v1139 = vunpack.c.0.s8 %v1138
          %v1140 = vlaneseq
          %v1141 = vshrl.u32 %v1140, 7
          %v1142 = vsub.s32 %v1139, %v1141
          %v1143 = vrot.slane %v1135, %v1142
          %v1145 = vunpack.c.l.s4 1983009808
          %v1146 = vunpack.c.0.s8 %v1145
          %v1147 = vlaneseq
          %v1148 = vshrl.u32 %v1147, 7
          %v1149 = vsub.s32 %v1146, %v1148
          %v1150 = vrot.slane %v1136, %v1149
          %v1151 = vcombine.low %v1143, %v1150
          %v1154 = vpack.c.bf16 %v1134, %v1134
          %v1155 = vpack.c.bf16 %v1151, %v1151
          %vm1156 = vcmask 517120
          %1157 = vst.msk [vmem:[#allocation6] sm:$0x3] %vm1156, 0
          %1158 = vst.msk [vmem:[#allocation6 + $0x8] sm:$0x3] %vm1156, 0
          %vm1159 = vcmask 523270
          %1160 = vst.msk [vmem:[#allocation6] sm:$0xc0] %vm1159, 0
          %1161 = vst.msk [vmem:[#allocation6 + $0x8] sm:$0xc0] %vm1159, 0
          %v1164 = vrot.slane %v1154, 6
          %v1165 = vrot.slane %v1155, 6
          %vm1168 = vcmask 521218
          %1169 = vst.msk [vmem:[#allocation6] sm:$0x3c] %vm1168, %v1164
          %1170 = vst.msk [vmem:[#allocation6 + $0x8] sm:$0x3c] %vm1168, %v1165
          %v1171 = vld [vmem:[#allocation6] sm:$0x3f]
          %v1172 = vld [vmem:[#allocation6 + $0x8] sm:$0x3f]
          %v1173 = vld [vmem:[#allocation7] sm:$0xf]
          %v1174 = vld [vmem:[#allocation7 + $0x4] sm:$0xf]
          %v1175 = vld [vmem:[#allocation7 + $0x8] sm:$0xf]
          %v1176 = vld [vmem:[#allocation7 + $0xc] sm:$0xf]
          %v1177 = vld [vmem:[#allocation7 + $0x10] sm:$0xf]
          %v1178 = vld [vmem:[#allocation7 + $0x14] sm:$0xf]
          %v1179 = vld [vmem:[#allocation7 + $0x18] sm:$0xf]
          %v1180 = vld [vmem:[#allocation7 + $0x1c] sm:$0xf]
          %v1181 = vld [vmem:[#allocation6] sm:$0x7e]
          %v1182 = vld [vmem:[#allocation6 + $0x8] sm:$0x7e]
          %s1183 = scalar_lea.vmem [#allocation7], 32
          %v1184 = vld [vmem:[%s1183] sm:$0xf]
          %v1185 = vld [vmem:[%s1183 + $0x4] sm:$0xf]
          %v1186 = vld [vmem:[%s1183 + $0x8] sm:$0xf]
          %v1187 = vld [vmem:[%s1183 + $0xc] sm:$0xf]
          %v1188 = vld [vmem:[%s1183 + $0x10] sm:$0xf]
          %v1189 = vld [vmem:[%s1183 + $0x14] sm:$0xf]
          %v1190 = vld [vmem:[%s1183 + $0x18] sm:$0xf]
          %v1191 = vld [vmem:[%s1183 + $0x1c] sm:$0xf]
          %v1194 = vcombine.high %v1181, %v1181
          %v1196 = vunpack.c.l.s4 1983009808
          %v1197 = vunpack.c.0.s8 %v1196
          %v1198 = vlaneseq
          %v1199 = vshrl.u32 %v1198, 7
          %v1200 = vsub.s32 %v1197, %v1199
          %v1201 = vrot.slane %v1181, %v1200
          %v1203 = vunpack.c.l.s4 1983009808
          %v1204 = vunpack.c.0.s8 %v1203
          %v1205 = vlaneseq
          %v1206 = vshrl.u32 %v1205, 7
          %v1207 = vsub.s32 %v1204, %v1206
          %v1208 = vrot.slane %v1194, %v1207
          %v1209 = vcombine.high %v1201, %v1201
          %v1210 = vcombine.high %v1208, %v1208
          %v1211 = vcombine.high %v1182, %v1182
          %v1213 = vunpack.c.l.s4 1983009808
          %v1214 = vunpack.c.0.s8 %v1213
          %v1215 = vlaneseq
          %v1216 = vshrl.u32 %v1215, 7
          %v1217 = vsub.s32 %v1214, %v1216
          %v1218 = vrot.slane %v1182, %v1217
          %v1220 = vunpack.c.l.s4 1983009808
          %v1221 = vunpack.c.0.s8 %v1220
          %v1222 = vlaneseq
          %v1223 = vshrl.u32 %v1222, 7
          %v1224 = vsub.s32 %v1221, %v1223
          %v1225 = vrot.slane %v1211, %v1224
          %v1226 = vcombine.high %v1218, %v1218
          %v1227 = vcombine.high %v1225, %v1225
          %vm1228 = vcmask 1040384
          %vm1229 = vcmask 1042434
          %vm1230 = vmor %vm1228, %vm1229
          %vm1231 = vcmask 1044484
          %vm1232 = vmor %vm1230, %vm1231
          %vm1233 = vcmask 1046534
          %vm1234 = vmor %vm1232, %vm1233
          %v1235 = vrot.slane %v1201, 7
          %v1236 = vrot.slane %v1235, 2
          %v1237 = vrot.slane %v1209, 7
          %v1238 = vsel %vm1234, %v1236, %v1237
          %v1239 = vrot.slane %v1237, 2
          %v1240 = vrot.slane %v1208, 7
          %v1241 = vsel %vm1234, %v1239, %v1240
          %v1242 = vrot.slane %v1240, 2
          %v1243 = vrot.slane %v1210, 7
          %v1244 = vsel %vm1234, %v1242, %v1243
          %v1245 = vrot.slane %v1218, 7
          %v1246 = vrot.slane %v1245, 2
          %v1247 = vrot.slane %v1226, 7
          %v1248 = vsel %vm1234, %v1246, %v1247
          %v1249 = vrot.slane %v1247, 2
          %v1250 = vrot.slane %v1225, 7
          %v1251 = vsel %vm1234, %v1249, %v1250
          %v1252 = vrot.slane %v1250, 2
          %v1253 = vrot.slane %v1227, 7
          %v1254 = vsel %vm1234, %v1252, %v1253
          %v1255 = vcombine.low %v1238, %v1241
          %v1256 = vcombine.low %v1244, %v1248
          %v1258 = vunpack.c.l.s4 1983009808
          %v1259 = vunpack.c.0.s8 %v1258
          %v1260 = vlaneseq
          %v1261 = vshrl.u32 %v1260, 7
          %v1262 = vsub.s32 %v1259, %v1261
          %v1263 = vrot.slane %v1255, %v1262
          %v1265 = vunpack.c.l.s4 1983009808
          %v1266 = vunpack.c.0.s8 %v1265
          %v1267 = vlaneseq
          %v1268 = vshrl.u32 %v1267, 7
          %v1269 = vsub.s32 %v1266, %v1268
          %v1270 = vrot.slane %v1256, %v1269
          %v1271 = vcombine.low %v1263, %v1270
          %v1272 = vcombine.low %v1251, %v1254
          %v1274 = vunpack.c.l.s4 1983009808
          %v1275 = vunpack.c.0.s8 %v1274
          %v1276 = vlaneseq
          %v1277 = vshrl.u32 %v1276, 7
          %v1278 = vsub.s32 %v1275, %v1277
          %v1279 = vrot.slane %v1272, %v1278
          %v1288 = vunpack.c.l.b16 %v1184
          %v1289 = vunpack.c.l.b16 %v1185
          %v1290 = vunpack.c.l.b16 %v1186
          %v1291 = vunpack.c.l.b16 %v1187
          %v1292 = vunpack.c.l.b16 %v1188
          %v1293 = vunpack.c.l.b16 %v1189
          %v1294 = vunpack.c.l.b16 %v1190
          %v1295 = vunpack.c.l.b16 %v1191
          %v1296 = vpack.c.b16 %v1289, %v1288
          %v1297 = vpack.c.b16 %v1291, %v1290
          %v1298 = vpack.c.b16 %v1293, %v1292
          %v1299 = vpack.c.b16 %v1295, %v1294
          %vm1304 = vcmask 523264
          %v1306 = vsel %vm1304, %v1271, 0
          %v1309 = vsel %vm1304, %v1279, 0
          %1311 = vmatprep.subr.bf16.mxu0 0
          %1312 = vmatpush1.bf16.msra.mxu0 %v1296
          %1313 = vmatprep.subr.bf16.mxu0 0
          %1314 = vmatpush1.bf16.msra.mxu0 %v1297
          %1315 = vmatprep.subr.bf16.mxu0 0
          %1316 = vmatpush1.bf16.msra.mxu0 %v1298
          %1317 = vmatprep.subr.bf16.mxu0 0
          %1318 = vmatpush1.bf16.msra.mxu0 %v1299
          %1319 = vmatprep.subr.bf16.mxu0 0
          %1320 = vmatpush1.bf16.msra.mxu0 0
          %1321 = vmatprep.subr.bf16.mxu0 0
          %1322 = vmatpush1.bf16.msra.mxu0 0
          %1323 = vmatprep.subr.bf16.mxu0 0
          %1324 = vmatpush1.bf16.msra.mxu0 0
          %1325 = vmatprep.subr.bf16.mxu0 0
          %1326 = vmatpush1.bf16.msra.mxu0 0
          %1327 = vmatprep.subr.bf16.mxu0 0
          %1328 = vmatpush1.bf16.msra.mxu0 0
          %1329 = vmatprep.subr.bf16.mxu0 0
          %1330 = vmatpush1.bf16.msra.mxu0 0
          %1331 = vmatprep.subr.bf16.mxu0 0
          %1332 = vmatpush1.bf16.msra.mxu0 0
          %1333 = vmatprep.subr.bf16.mxu0 0
          %1334 = vmatpush1.bf16.msra.mxu0 0
          %1335 = vmatprep.subr.bf16.mxu0 0
          %1336 = vmatpush1.bf16.msra.mxu0 0
          %1337 = vmatprep.subr.bf16.mxu0 0
          %1338 = vmatpush1.bf16.msra.mxu0 0
          %1339 = vmatprep.subr.bf16.mxu0 0
          %1340 = vmatpush1.bf16.msra.mxu0 0
          %1341 = vmatprep.subr.bf16.mxu0 0
          %1342 = vmatpush1.bf16.msra.mxu0 0
          %1343 = vmatprep.mubr.bf16.mxu0 0
          %1344 = vmatmul.mubr.bf16.gmra.mrb[0].mxu0 %v1306
          %v1345 = vpop.f32.mrb[0].mxu0
          %v1346 = vadd.f32 0.0, %v1345
          %v1347 = vpop.f32.mrb[0].mxu0
          %v1348 = vpop.f32.mrb[0].mxu0
          %v1349 = vadd.f32 0.0, %v1348
          %v1350 = vpop.f32.mrb[0].mxu0
          %1351 = vmatprep.mubr.bf16.mxu0 0
          %1352 = vmatmul.mubr.bf16.gmra.mrb[0].mxu0 %v1309
          %v1353 = vpop.f32.mrb[0].mxu0
          %v1354 = vadd.f32 0.0, %v1353
          %v1355 = vpop.f32.mrb[0].mxu0
          %v1356 = vpop.f32.mrb[0].mxu0
          %v1357 = vpop.f32.mrb[0].mxu0
          %1358 = vdwg.mxu0
          %v1361 = vcombine.high %v1171, %v1171
          %v1363 = vunpack.c.l.s4 1983009808
          %v1364 = vunpack.c.0.s8 %v1363
          %v1365 = vlaneseq
          %v1366 = vshrl.u32 %v1365, 7
          %v1367 = vsub.s32 %v1364, %v1366
          %v1368 = vrot.slane %v1171, %v1367
          %v1370 = vunpack.c.l.s4 1983009808
          %v1371 = vunpack.c.0.s8 %v1370
          %v1372 = vlaneseq
          %v1373 = vshrl.u32 %v1372, 7
          %v1374 = vsub.s32 %v1371, %v1373
          %v1375 = vrot.slane %v1361, %v1374
          %v1376 = vcombine.high %v1368, %v1368
          %v1377 = vcombine.high %v1172, %v1172
          %v1379 = vunpack.c.l.s4 1983009808
          %v1380 = vunpack.c.0.s8 %v1379
          %v1381 = vlaneseq
          %v1382 = vshrl.u32 %v1381, 7
          %v1383 = vsub.s32 %v1380, %v1382
          %v1384 = vrot.slane %v1172, %v1383
          %v1386 = vunpack.c.l.s4 1983009808
          %v1387 = vunpack.c.0.s8 %v1386
          %v1388 = vlaneseq
          %v1389 = vshrl.u32 %v1388, 7
          %v1390 = vsub.s32 %v1387, %v1389
          %v1391 = vrot.slane %v1377, %v1390
          %v1392 = vcombine.high %v1384, %v1384
          %v1393 = vcombine.low %v1368, %v1376
          %v1394 = vcombine.low %v1375, %v1384
          %v1396 = vunpack.c.l.s4 1983009808
          %v1397 = vunpack.c.0.s8 %v1396
          %v1398 = vlaneseq
          %v1399 = vshrl.u32 %v1398, 7
          %v1400 = vsub.s32 %v1397, %v1399
          %v1401 = vrot.slane %v1393, %v1400
          %v1403 = vunpack.c.l.s4 1983009808
          %v1404 = vunpack.c.0.s8 %v1403
          %v1405 = vlaneseq
          %v1406 = vshrl.u32 %v1405, 7
          %v1407 = vsub.s32 %v1404, %v1406
          %v1408 = vrot.slane %v1394, %v1407
          %v1409 = vcombine.low %v1401, %v1408
          %v1410 = vcombine.low %v1392, %v1391
          %v1412 = vunpack.c.l.s4 1983009808
          %v1413 = vunpack.c.0.s8 %v1412
          %v1414 = vlaneseq
          %v1415 = vshrl.u32 %v1414, 7
          %v1416 = vsub.s32 %v1413, %v1415
          %v1417 = vrot.slane %v1410, %v1416
          %v1426 = vunpack.c.l.b16 %v1173
          %v1427 = vunpack.c.l.b16 %v1174
          %v1428 = vunpack.c.l.b16 %v1175
          %v1429 = vunpack.c.l.b16 %v1176
          %v1430 = vunpack.c.l.b16 %v1177
          %v1431 = vunpack.c.l.b16 %v1178
          %v1432 = vunpack.c.l.b16 %v1179
          %v1433 = vunpack.c.l.b16 %v1180
          %v1434 = vpack.c.b16 %v1427, %v1426
          %v1435 = vpack.c.b16 %v1429, %v1428
          %v1436 = vpack.c.b16 %v1431, %v1430
          %v1437 = vpack.c.b16 %v1433, %v1432
          %v1443 = vsel %vm1304, %v1409, 0
          %v1446 = vsel %vm1304, %v1417, 0
          %1448 = vmatprep.subr.bf16.mxu0 0
          %1449 = vmatpush1.bf16.msra.mxu0 %v1434
          %1450 = vmatprep.subr.bf16.mxu0 0
          %1451 = vmatpush1.bf16.msra.mxu0 %v1435
          %1452 = vmatprep.subr.bf16.mxu0 0
          %1453 = vmatpush1.bf16.msra.mxu0 %v1436
          %1454 = vmatprep.subr.bf16.mxu0 0
          %1455 = vmatpush1.bf16.msra.mxu0 %v1437
          %1456 = vmatprep.subr.bf16.mxu0 0
          %1457 = vmatpush1.bf16.msra.mxu0 0
          %1458 = vmatprep.subr.bf16.mxu0 0
          %1459 = vmatpush1.bf16.msra.mxu0 0
          %1460 = vmatprep.subr.bf16.mxu0 0
          %1461 = vmatpush1.bf16.msra.mxu0 0
          %1462 = vmatprep.subr.bf16.mxu0 0
          %1463 = vmatpush1.bf16.msra.mxu0 0
          %1464 = vmatprep.subr.bf16.mxu0 0
          %1465 = vmatpush1.bf16.msra.mxu0 0
          %1466 = vmatprep.subr.bf16.mxu0 0
          %1467 = vmatpush1.bf16.msra.mxu0 0
          %1468 = vmatprep.subr.bf16.mxu0 0
          %1469 = vmatpush1.bf16.msra.mxu0 0
          %1470 = vmatprep.subr.bf16.mxu0 0
          %1471 = vmatpush1.bf16.msra.mxu0 0
          %1472 = vmatprep.subr.bf16.mxu0 0
          %1473 = vmatpush1.bf16.msra.mxu0 0
          %1474 = vmatprep.subr.bf16.mxu0 0
          %1475 = vmatpush1.bf16.msra.mxu0 0
          %1476 = vmatprep.subr.bf16.mxu0 0
          %1477 = vmatpush1.bf16.msra.mxu0 0
          %1478 = vmatprep.subr.bf16.mxu0 0
          %1479 = vmatpush1.bf16.msra.mxu0 0
          %1480 = vmatprep.mubr.bf16.mxu0 0
          %1481 = vmatmul.mubr.bf16.gmra.mrb[0].mxu0 %v1443
          %v1482 = vpop.f32.mrb[0].mxu0
          %v1483 = vadd.f32 %v1346, %v1482
          %v1484 = vpop.f32.mrb[0].mxu0
          %v1485 = vpop.f32.mrb[0].mxu0
          %v1486 = vadd.f32 %v1349, %v1485
          %v1487 = vpop.f32.mrb[0].mxu0
          %1488 = vmatprep.mubr.bf16.mxu0 0
          %1489 = vmatmul.mubr.bf16.gmra.mrb[0].mxu0 %v1446
          %v1490 = vpop.f32.mrb[0].mxu0
          %v1491 = vadd.f32 %v1354, %v1490
          %v1492 = vpop.f32.mrb[0].mxu0
          %v1493 = vpop.f32.mrb[0].mxu0
          %v1494 = vpop.f32.mrb[0].mxu0
          %1495 = vdwg.mxu0
          %v1499 = vcombine.high %v1483, %v1483
          %v1500 = vcombine.high %v1486, %v1486
          %v1501 = vcombine.high %v1491, %v1491
          %v1505 = vld [vmem:[#allocation6] sm:$0xfc]
          %v1506 = vld [vmem:[#allocation6 + $0x8] sm:$0xfc]
          %s1507 = scalar_lea.vmem [#allocation7], 64
          %v1508 = vld [vmem:[%s1507] sm:$0xf]
          %v1509 = vld [vmem:[%s1507 + $0x4] sm:$0xf]
          %v1510 = vld [vmem:[%s1507 + $0x8] sm:$0xf]
          %v1511 = vld [vmem:[%s1507 + $0xc] sm:$0xf]
          %v1512 = vld [vmem:[%s1507 + $0x10] sm:$0xf]
          %v1513 = vld [vmem:[%s1507 + $0x14] sm:$0xf]
          %v1514 = vld [vmem:[%s1507 + $0x18] sm:$0xf]
          %v1515 = vld [vmem:[%s1507 + $0x1c] sm:$0xf]
          %v1518 = vcombine.high %v1505, %v1505
          %v1520 = vunpack.c.l.s4 1983009808
          %v1521 = vunpack.c.0.s8 %v1520
          %v1522 = vlaneseq
          %v1523 = vshrl.u32 %v1522, 7
          %v1524 = vsub.s32 %v1521, %v1523
          %v1525 = vrot.slane %v1505, %v1524
          %v1527 = vunpack.c.l.s4 1983009808
          %v1528 = vunpack.c.0.s8 %v1527
          %v1529 = vlaneseq
          %v1530 = vshrl.u32 %v1529, 7
          %v1531 = vsub.s32 %v1528, %v1530
          %v1532 = vrot.slane %v1518, %v1531
          %v1533 = vcombine.high %v1525, %v1525
          %v1534 = vcombine.high %v1532, %v1532
          %v1535 = vcombine.high %v1506, %v1506
          %v1537 = vunpack.c.l.s4 1983009808
          %v1538 = vunpack.c.0.s8 %v1537
          %v1539 = vlaneseq
          %v1540 = vshrl.u32 %v1539, 7
          %v1541 = vsub.s32 %v1538, %v1540
          %v1542 = vrot.slane %v1506, %v1541
          %v1544 = vunpack.c.l.s4 1983009808
          %v1545 = vunpack.c.0.s8 %v1544
          %v1546 = vlaneseq
          %v1547 = vshrl.u32 %v1546, 7
          %v1548 = vsub.s32 %v1545, %v1547
          %v1549 = vrot.slane %v1535, %v1548
          %v1550 = vcombine.high %v1542, %v1542
          %v1551 = vcombine.high %v1549, %v1549
          %v1552 = vcombine.low %v1533, %v1532
          %v1553 = vcombine.low %v1534, %v1550
          %v1555 = vunpack.c.l.s4 1983009808
          %v1556 = vunpack.c.0.s8 %v1555
          %v1557 = vlaneseq
          %v1558 = vshrl.u32 %v1557, 7
          %v1559 = vsub.s32 %v1556, %v1558
          %v1560 = vrot.slane %v1552, %v1559
          %v1562 = vunpack.c.l.s4 1983009808
          %v1563 = vunpack.c.0.s8 %v1562
          %v1564 = vlaneseq
          %v1565 = vshrl.u32 %v1564, 7
          %v1566 = vsub.s32 %v1563, %v1565
          %v1567 = vrot.slane %v1553, %v1566
          %v1568 = vcombine.low %v1560, %v1567
          %v1569 = vcombine.low %v1549, %v1551
          %v1571 = vunpack.c.l.s4 1983009808
          %v1572 = vunpack.c.0.s8 %v1571
          %v1573 = vlaneseq
          %v1574 = vshrl.u32 %v1573, 7
          %v1575 = vsub.s32 %v1572, %v1574
          %v1576 = vrot.slane %v1569, %v1575
          %v1585 = vunpack.c.l.b16 %v1508
          %v1586 = vunpack.c.l.b16 %v1509
          %v1587 = vunpack.c.l.b16 %v1510
          %v1588 = vunpack.c.l.b16 %v1511
          %v1589 = vunpack.c.l.b16 %v1512
          %v1590 = vunpack.c.l.b16 %v1513
          %v1591 = vunpack.c.l.b16 %v1514
          %v1592 = vunpack.c.l.b16 %v1515
          %v1593 = vpack.c.b16 %v1586, %v1585
          %v1594 = vpack.c.b16 %v1588, %v1587
          %v1595 = vpack.c.b16 %v1590, %v1589
          %v1596 = vpack.c.b16 %v1592, %v1591
          %v1602 = vsel %vm1304, %v1568, 0
          %v1605 = vsel %vm1304, %v1576, 0
          %1607 = vmatprep.subr.bf16.mxu0 0
          %1608 = vmatpush1.bf16.msra.mxu0 %v1593
          %1609 = vmatprep.subr.bf16.mxu0 0
          %1610 = vmatpush1.bf16.msra.mxu0 %v1594
          %1611 = vmatprep.subr.bf16.mxu0 0
          %1612 = vmatpush1.bf16.msra.mxu0 %v1595
          %1613 = vmatprep.subr.bf16.mxu0 0
          %1614 = vmatpush1.bf16.msra.mxu0 %v1596
          %1615 = vmatprep.subr.bf16.mxu0 0
          %1616 = vmatpush1.bf16.msra.mxu0 0
          %1617 = vmatprep.subr.bf16.mxu0 0
          %1618 = vmatpush1.bf16.msra.mxu0 0
          %1619 = vmatprep.subr.bf16.mxu0 0
          %1620 = vmatpush1.bf16.msra.mxu0 0
          %1621 = vmatprep.subr.bf16.mxu0 0
          %1622 = vmatpush1.bf16.msra.mxu0 0
          %1623 = vmatprep.subr.bf16.mxu0 0
          %1624 = vmatpush1.bf16.msra.mxu0 0
          %1625 = vmatprep.subr.bf16.mxu0 0
          %1626 = vmatpush1.bf16.msra.mxu0 0
          %1627 = vmatprep.subr.bf16.mxu0 0
          %1628 = vmatpush1.bf16.msra.mxu0 0
          %1629 = vmatprep.subr.bf16.mxu0 0
          %1630 = vmatpush1.bf16.msra.mxu0 0
          %1631 = vmatprep.subr.bf16.mxu0 0
          %1632 = vmatpush1.bf16.msra.mxu0 0
          %1633 = vmatprep.subr.bf16.mxu0 0
          %1634 = vmatpush1.bf16.msra.mxu0 0
          %1635 = vmatprep.subr.bf16.mxu0 0
          %1636 = vmatpush1.bf16.msra.mxu0 0
          %1637 = vmatprep.subr.bf16.mxu0 0
          %1638 = vmatpush1.bf16.msra.mxu0 0
          %1639 = vmatprep.mubr.bf16.mxu0 0
          %1640 = vmatmul.mubr.bf16.gmra.mrb[0].mxu0 %v1602
          %v1641 = vpop.f32.mrb[0].mxu0
          %v1642 = vadd.f32 0.0, %v1641
          %v1643 = vpop.f32.mrb[0].mxu0
          %v1644 = vpop.f32.mrb[0].mxu0
          %v1645 = vadd.f32 0.0, %v1644
          %v1646 = vpop.f32.mrb[0].mxu0
          %1647 = vmatprep.mubr.bf16.mxu0 0
          %1648 = vmatmul.mubr.bf16.gmra.mrb[0].mxu0 %v1605
          %v1649 = vpop.f32.mrb[0].mxu0
          %v1650 = vadd.f32 0.0, %v1649
          %v1651 = vpop.f32.mrb[0].mxu0
          %v1652 = vpop.f32.mrb[0].mxu0
          %v1653 = vpop.f32.mrb[0].mxu0
          %1654 = vdwg.mxu0
          %v1658 = vcombine.high %v1642, %v1642
          %v1659 = vcombine.high %v1645, %v1645
          %v1660 = vcombine.high %v1650, %v1650
          %v1664 = vadd.f32 %v1483, %v1642
          %v1665 = vadd.f32 %v1499, %v1658
          %v1666 = vadd.f32 %v1486, %v1645
          %v1667 = vadd.f32 %v1500, %v1659
          %v1668 = vadd.f32 %v1491, %v1650
          %v1669 = vadd.f32 %v1501, %v1660
          %v1670 = vld [vmem:[#allocation4] sm:$0x1]
          %v1675 = vcombine.low %v1664, %v1665
          %v1676 = vcombine.low %v1667, %v1668
          %v1679 = vadd.f32 %v1675, %v1676
          %vm1680 = vcmask 1043456
          %v1681 = vsel %vm1680, %v1666, 0.0
          %v1682 = vsel %vm1680, %v1669, 0.0
          %v1683 = vadd.f32 %v1681, %v1682
          %v1684 = vsel %vm1680, %v1683, 0.0
          %v1685 = vadd.f32 %v1679, %v1684
          %v1686 = vrot.slane %v1685, 4
          %v1687 = vadd.f32 %v1685, %v1686
          %v1688 = vrot.slane %v1687, 2
          %v1689 = vadd.f32 %v1687, %v1688
          %v1690 = vrot.slane %v1689, 1
          %v1691 = vadd.f32 %v1689, %v1690
          %v1692 = vadd.f32 %v1670, %v1691
          %1693 = vst [vmem:[#allocation4] sm:$0x1] %v1692
          %v1694 = vld [vmem:[#allocation5] sm:$0x1]
          %v1695 = vmul.f32 %v1664, %v1664
          %v1696 = vmul.f32 %v1665, %v1665
          %v1697 = vmul.f32 %v1666, %v1666
          %v1698 = vmul.f32 %v1667, %v1667
          %v1699 = vmul.f32 %v1668, %v1668
          %v1700 = vmul.f32 %v1669, %v1669
          %v1705 = vcombine.low %v1695, %v1696
          %v1706 = vcombine.low %v1698, %v1699
          %v1709 = vadd.f32 %v1705, %v1706
          %v1710 = vsel %vm1680, %v1697, 0.0
          %v1711 = vsel %vm1680, %v1700, 0.0
          %v1712 = vadd.f32 %v1710, %v1711
          %v1713 = vsel %vm1680, %v1712, 0.0
          %v1714 = vadd.f32 %v1709, %v1713
          %v1715 = vrot.slane %v1714, 4
          %v1716 = vadd.f32 %v1714, %v1715
          %v1717 = vrot.slane %v1716, 2
          %v1718 = vadd.f32 %v1716, %v1717
          %v1719 = vrot.slane %v1718, 1
          %v1720 = vadd.f32 %v1718, %v1719
          %v1721 = vadd.f32 %v1694, %v1720
          %1722 = vst [vmem:[#allocation5] sm:$0x1] %v1721
        $region64: #{tpu_custom_call.1} parent=47 // pred_fallthru
          _
        %p1723 = scmp.eq.s32.totalorder %s24, 2
        // Predicated region
        $region65: #{tpu_custom_call.1} parent=47 // pred_check
          %p1724 = pneg %p1723
        $region66: #{tpu_custom_call.1} parent=47 // pred_check_branch
          %1726 = sbr.rel (%p1724) target = $region68
        $region67: #{tpu_custom_call.1} parent=47 // pred_region
          %v1727 = vld [vmem:[%s300] sm:$0xf]
          %v1728 = vld [vmem:[%s300 + $0x4] sm:$0x1]
          %v1729 = vld [vmem:[%s300 + $0x8] sm:$0xf]
          %v1730 = vld [vmem:[%s300 + $0xc] sm:$0x1]
          %v1731 = vld [vmem:[%s1] sm:$0xf]
          %v1732 = vld [vmem:[%s1 + $0x4] sm:$0x3]
          %v1738 = vunpack.c.l.s4 1966171168
          %v1739 = vunpack.c.0.s8 %v1738
          %v1740 = vlaneseq
          %v1741 = vshrl.u32 %v1740, 7
          %v1742 = vsub.s32 %v1739, %v1741
          %v1743 = vrot.slane %v1727, %v1742
          %v1744 = vcombine.high %v1743, %v1743
          %v1746 = vunpack.c.l.s4 1966171168
          %v1747 = vunpack.c.0.s8 %v1746
          %v1748 = vlaneseq
          %v1749 = vshrl.u32 %v1748, 7
          %v1750 = vsub.s32 %v1747, %v1749
          %v1751 = vrot.slane %v1743, %v1750
          %v1753 = vunpack.c.l.s4 1966171168
          %v1754 = vunpack.c.0.s8 %v1753
          %v1755 = vlaneseq
          %v1756 = vshrl.u32 %v1755, 7
          %v1757 = vsub.s32 %v1754, %v1756
          %v1758 = vrot.slane %v1744, %v1757
          %v1759 = vcombine.high %v1751, %v1751
          %v1760 = vcombine.high %v1758, %v1758
          %v1762 = vunpack.c.l.s4 1966171168
          %v1763 = vunpack.c.0.s8 %v1762
          %v1764 = vlaneseq
          %v1765 = vshrl.u32 %v1764, 7
          %v1766 = vsub.s32 %v1763, %v1765
          %v1767 = vrot.slane %v1728, %v1766
          %v1769 = vunpack.c.l.s4 1966171168
          %v1770 = vunpack.c.0.s8 %v1769
          %v1771 = vlaneseq
          %v1772 = vshrl.u32 %v1771, 7
          %v1773 = vsub.s32 %v1770, %v1772
          %v1774 = vrot.slane %v1767, %v1773
          %v1776 = vunpack.c.l.s4 1966171168
          %v1777 = vunpack.c.0.s8 %v1776
          %v1778 = vlaneseq
          %v1779 = vshrl.u32 %v1778, 7
          %v1780 = vsub.s32 %v1777, %v1779
          %v1781 = vrot.slane %v1729, %v1780
          %v1782 = vcombine.high %v1781, %v1781
          %v1784 = vunpack.c.l.s4 1966171168
          %v1785 = vunpack.c.0.s8 %v1784
          %v1786 = vlaneseq
          %v1787 = vshrl.u32 %v1786, 7
          %v1788 = vsub.s32 %v1785, %v1787
          %v1789 = vrot.slane %v1781, %v1788
          %v1791 = vunpack.c.l.s4 1966171168
          %v1792 = vunpack.c.0.s8 %v1791
          %v1793 = vlaneseq
          %v1794 = vshrl.u32 %v1793, 7
          %v1795 = vsub.s32 %v1792, %v1794
          %v1796 = vrot.slane %v1782, %v1795
          %v1797 = vcombine.high %v1789, %v1789
          %v1798 = vcombine.high %v1796, %v1796
          %v1800 = vunpack.c.l.s4 1966171168
          %v1801 = vunpack.c.0.s8 %v1800
          %v1802 = vlaneseq
          %v1803 = vshrl.u32 %v1802, 7
          %v1804 = vsub.s32 %v1801, %v1803
          %v1805 = vrot.slane %v1730, %v1804
          %v1807 = vunpack.c.l.s4 1966171168
          %v1808 = vunpack.c.0.s8 %v1807
          %v1809 = vlaneseq
          %v1810 = vshrl.u32 %v1809, 7
          %v1811 = vsub.s32 %v1808, %v1810
          %v1812 = vrot.slane %v1805, %v1811
          %v1813 = vcombine.low %v1751, %v1758
          %v1814 = vcombine.low %v1759, %v1760
          %v1815 = vcombine.low %v1774, %v1789
          %v1816 = vcombine.low %v1796, %v1797
          %v1818 = vunpack.c.l.s4 1966171168
          %v1819 = vunpack.c.0.s8 %v1818
          %v1820 = vlaneseq
          %v1821 = vshrl.u32 %v1820, 7
          %v1822 = vsub.s32 %v1819, %v1821
          %v1823 = vrot.slane %v1813, %v1822
          %v1825 = vunpack.c.l.s4 1966171168
          %v1826 = vunpack.c.0.s8 %v1825
          %v1827 = vlaneseq
          %v1828 = vshrl.u32 %v1827, 7
          %v1829 = vsub.s32 %v1826, %v1828
          %v1830 = vrot.slane %v1814, %v1829
          %v1832 = vunpack.c.l.s4 1966171168
          %v1833 = vunpack.c.0.s8 %v1832
          %v1834 = vlaneseq
          %v1835 = vshrl.u32 %v1834, 7
          %v1836 = vsub.s32 %v1833, %v1835
          %v1837 = vrot.slane %v1815, %v1836
          %v1839 = vunpack.c.l.s4 1966171168
          %v1840 = vunpack.c.0.s8 %v1839
          %v1841 = vlaneseq
          %v1842 = vshrl.u32 %v1841, 7
          %v1843 = vsub.s32 %v1840, %v1842
          %v1844 = vrot.slane %v1816, %v1843
          %v1845 = vcombine.low %v1823, %v1830
          %v1846 = vcombine.low %v1837, %v1844
          %v1848 = vunpack.c.l.s4 1966171168
          %v1849 = vunpack.c.0.s8 %v1848
          %v1850 = vlaneseq
          %v1851 = vshrl.u32 %v1850, 7
          %v1852 = vsub.s32 %v1849, %v1851
          %v1853 = vrot.slane %v1845, %v1852
          %v1855 = vunpack.c.l.s4 1966171168
          %v1856 = vunpack.c.0.s8 %v1855
          %v1857 = vlaneseq
          %v1858 = vshrl.u32 %v1857, 7
          %v1859 = vsub.s32 %v1856, %v1858
          %v1860 = vrot.slane %v1846, %v1859
          %v1861 = vcombine.low %v1853, %v1860
          %v1862 = vcombine.low %v1798, %v1812
          %v1864 = vunpack.c.l.s4 1966171168
          %v1865 = vunpack.c.0.s8 %v1864
          %v1866 = vlaneseq
          %v1867 = vshrl.u32 %v1866, 7
          %v1868 = vsub.s32 %v1865, %v1867
          %v1869 = vrot.slane %v1862, %v1868
          %v1871 = vunpack.c.l.s4 1966171168
          %v1872 = vunpack.c.0.s8 %v1871
          %v1873 = vlaneseq
          %v1874 = vshrl.u32 %v1873, 7
          %v1875 = vsub.s32 %v1872, %v1874
          %v1876 = vrot.slane %v1869, %v1875
          %v1879 = vunpack.c.l.b16 %v1731
          %v1880 = vunpack.c.l.b16 %v1732
          %v1881 = vpack.c.b16 %v1880, %v1879
          %vm1882 = vcmask 97280
          %v1884 = vsel %vm1882, %v1861, 0
          %v1887 = vsel %vm1882, %v1876, 0
          %vm1889 = vcmask 1045504
          %v1891 = vsel %vm1889, %v1881, 0
          %1893 = vmatprep.subr.bf16.mxu0 0
          %1894 = vmatpush1.bf16.msra.mxu0 %v1891
          %1895 = vmatprep.subr.bf16.mxu0 0
          %1896 = vmatpush1.bf16.msra.mxu0 0
          %1897 = vmatprep.subr.bf16.mxu0 0
          %1898 = vmatpush1.bf16.msra.mxu0 0
          %1899 = vmatprep.subr.bf16.mxu0 0
          %1900 = vmatpush1.bf16.msra.mxu0 0
          %1901 = vmatprep.subr.bf16.mxu0 0
          %1902 = vmatpush1.bf16.msra.mxu0 0
          %1903 = vmatprep.subr.bf16.mxu0 0
          %1904 = vmatpush1.bf16.msra.mxu0 0
          %1905 = vmatprep.subr.bf16.mxu0 0
          %1906 = vmatpush1.bf16.msra.mxu0 0
          %1907 = vmatprep.subr.bf16.mxu0 0
          %1908 = vmatpush1.bf16.msra.mxu0 0
          %1909 = vmatprep.subr.bf16.mxu0 0
          %1910 = vmatpush1.bf16.msra.mxu0 0
          %1911 = vmatprep.subr.bf16.mxu0 0
          %1912 = vmatpush1.bf16.msra.mxu0 0
          %1913 = vmatprep.subr.bf16.mxu0 0
          %1914 = vmatpush1.bf16.msra.mxu0 0
          %1915 = vmatprep.subr.bf16.mxu0 0
          %1916 = vmatpush1.bf16.msra.mxu0 0
          %1917 = vmatprep.subr.bf16.mxu0 0
          %1918 = vmatpush1.bf16.msra.mxu0 0
          %1919 = vmatprep.subr.bf16.mxu0 0
          %1920 = vmatpush1.bf16.msra.mxu0 0
          %1921 = vmatprep.subr.bf16.mxu0 0
          %1922 = vmatpush1.bf16.msra.mxu0 0
          %1923 = vmatprep.subr.bf16.mxu0 0
          %1924 = vmatpush1.bf16.msra.mxu0 0
          %1925 = vmatprep.mubr.bf16.mxu0 0
          %1926 = vmatmul.mubr.bf16.gmra.mrb[0].mxu0 %v1884
          %v1927 = vpop.f32.mrb[0].mxu0
          %v1928 = vadd.f32 0.0, %v1927
          %v1929 = vpop.f32.mrb[0].mxu0
          %v1930 = vpop.f32.mrb[0].mxu0
          %v1931 = vadd.f32 0.0, %v1930
          %v1932 = vpop.f32.mrb[0].mxu0
          %1933 = vmatprep.mubr.bf16.mxu0 0
          %1934 = vmatmul.mubr.bf16.gmra.mrb[0].mxu0 %v1887
          %v1935 = vpop.f32.mrb[0].mxu0
          %v1936 = vadd.f32 0.0, %v1935
          %v1937 = vpop.f32.mrb[0].mxu0
          %v1938 = vpop.f32.mrb[0].mxu0
          %v1939 = vpop.f32.mrb[0].mxu0
          %1940 = vdwg.mxu0
          %v1944 = vcombine.high %v1928, %v1928
          %v1946 = vunpack.c.l.s4 1983009808
          %v1947 = vunpack.c.0.s8 %v1946
          %v1948 = vlaneseq
          %v1949 = vshrl.u32 %v1948, 7
          %v1950 = vsub.s32 %v1947, %v1949
          %v1951 = vrot.slane %v1928, %v1950
          %v1953 = vunpack.c.l.s4 1983009808
          %v1954 = vunpack.c.0.s8 %v1953
          %v1955 = vlaneseq
          %v1956 = vshrl.u32 %v1955, 7
          %v1957 = vsub.s32 %v1954, %v1956
          %v1958 = vrot.slane %v1944, %v1957
          %v1959 = vcombine.high %v1951, %v1951
          %v1960 = vcombine.high %v1958, %v1958
          %v1961 = vcombine.high %v1931, %v1931
          %v1963 = vunpack.c.l.s4 1983009808
          %v1964 = vunpack.c.0.s8 %v1963
          %v1965 = vlaneseq
          %v1966 = vshrl.u32 %v1965, 7
          %v1967 = vsub.s32 %v1964, %v1966
          %v1968 = vrot.slane %v1931, %v1967
          %v1970 = vunpack.c.l.s4 1983009808
          %v1971 = vunpack.c.0.s8 %v1970
          %v1972 = vlaneseq
          %v1973 = vshrl.u32 %v1972, 7
          %v1974 = vsub.s32 %v1971, %v1973
          %v1975 = vrot.slane %v1961, %v1974
          %v1976 = vcombine.high %v1968, %v1968
          %v1977 = vcombine.high %v1975, %v1975
          %v1979 = vunpack.c.l.s4 1983009808
          %v1980 = vunpack.c.0.s8 %v1979
          %v1981 = vlaneseq
          %v1982 = vshrl.u32 %v1981, 7
          %v1983 = vsub.s32 %v1980, %v1982
          %v1984 = vrot.slane %v1936, %v1983
          %v1993 = vld [vmem:[#allocation2] sm:$0x1]
          %v1994 = vrcp.pop 20.0
          %v1995 = vmul.f32 %v1993, %v1994
          %v1996 = vld [vmem:[#allocation3] sm:$0x1]
          %v1997 = vmul.f32 %v1996, %v1994
          %v1998 = vmul.f32 %v1995, %v1995
          %v1999 = vsub.f32 %v1997, %v1998
          %v2000 = vmax.f32 %v1999, 0.0
          %v2001 = vadd.f32 %v2000, 1e-05
          %v2002 = vrsqrt.pop %v2001
          %v2003 = vld [vmem:[%s2] sm:$0x1]
          %v2004 = vmul.f32 %v2003, %v2002
          %v2005 = vld [vmem:[%s3] sm:$0x1]
          %v2006 = vmul.f32 %v1995, %v2004
          %v2007 = vsub.f32 %v2005, %v2006
          %v2009 = vlaneseq
          %v2010 = vshrl.u32 %v2009, 7
          %v2011 = vsub.s32 0, %v2010
          %v2012 = vrot.slane %v2004, %v2011
          %v2013 = vcombine.high %v2012, %v2012
          %v2015 = vunpack.c.l.s4 1983009808
          %v2016 = vunpack.c.0.s8 %v2015
          %v2017 = vlaneseq
          %v2018 = vshrl.u32 %v2017, 7
          %v2019 = vsub.s32 %v2016, %v2018
          %v2020 = vrot.slane %v2012, %v2019
          %v2022 = vunpack.c.l.s4 1983009808
          %v2023 = vunpack.c.0.s8 %v2022
          %v2024 = vlaneseq
          %v2025 = vshrl.u32 %v2024, 7
          %v2026 = vsub.s32 %v2023, %v2025
          %v2027 = vrot.slane %v2013, %v2026
          %v2028 = vcombine.high %v2020, %v2020
          %v2029 = vcombine.high %v2027, %v2027
          %v2034 = vmul.f32 %v1951, %v2020
          %v2035 = vmul.f32 %v1959, %v2028
          %v2036 = vmul.f32 %v1958, %v2027
          %v2037 = vmul.f32 %v1960, %v2029
          %v2038 = vmul.f32 %v1976, %v2020
          %v2039 = vmul.f32 %v1975, %v2028
          %v2040 = vmul.f32 %v1977, %v2027
          %v2041 = vmul.f32 %v1984, %v2029
          %v2043 = vlaneseq
          %v2044 = vshrl.u32 %v2043, 7
          %v2045 = vsub.s32 0, %v2044
          %v2046 = vrot.slane %v2007, %v2045
          %v2047 = vcombine.high %v2046, %v2046
          %v2049 = vunpack.c.l.s4 1983009808
          %v2050 = vunpack.c.0.s8 %v2049
          %v2051 = vlaneseq
          %v2052 = vshrl.u32 %v2051, 7
          %v2053 = vsub.s32 %v2050, %v2052
          %v2054 = vrot.slane %v2046, %v2053
          %v2056 = vunpack.c.l.s4 1983009808
          %v2057 = vunpack.c.0.s8 %v2056
          %v2058 = vlaneseq
          %v2059 = vshrl.u32 %v2058, 7
          %v2060 = vsub.s32 %v2057, %v2059
          %v2061 = vrot.slane %v2047, %v2060
          %v2062 = vcombine.high %v2054, %v2054
          %v2063 = vcombine.high %v2061, %v2061
          %v2068 = vadd.f32 %v2034, %v2054
          %v2069 = vadd.f32 %v2035, %v2062
          %v2070 = vadd.f32 %v2036, %v2061
          %v2071 = vadd.f32 %v2037, %v2063
          %v2072 = vadd.f32 %v2038, %v2054
          %v2073 = vadd.f32 %v2039, %v2062
          %v2074 = vadd.f32 %v2040, %v2061
          %v2075 = vadd.f32 %v2041, %v2063
          %v2076 = vmax.f32 %v2068, 0.0
          %v2077 = vmax.f32 %v2069, 0.0
          %v2078 = vmax.f32 %v2070, 0.0
          %v2079 = vmax.f32 %v2071, 0.0
          %v2080 = vmax.f32 %v2072, 0.0
          %v2081 = vmax.f32 %v2073, 0.0
          %v2082 = vmax.f32 %v2074, 0.0
          %v2083 = vmax.f32 %v2075, 0.0
          %v2092 = vcombine.low %v2076, %v2077
          %v2093 = vcombine.low %v2078, %v2079
          %v2095 = vunpack.c.l.s4 1983009808
          %v2096 = vunpack.c.0.s8 %v2095
          %v2097 = vlaneseq
          %v2098 = vshrl.u32 %v2097, 7
          %v2099 = vsub.s32 %v2096, %v2098
          %v2100 = vrot.slane %v2092, %v2099
          %v2102 = vunpack.c.l.s4 1983009808
          %v2103 = vunpack.c.0.s8 %v2102
          %v2104 = vlaneseq
          %v2105 = vshrl.u32 %v2104, 7
          %v2106 = vsub.s32 %v2103, %v2105
          %v2107 = vrot.slane %v2093, %v2106
          %v2108 = vcombine.low %v2100, %v2107
          %v2109 = vcombine.low %v2080, %v2081
          %v2110 = vcombine.low %v2082, %v2083
          %v2112 = vunpack.c.l.s4 1983009808
          %v2113 = vunpack.c.0.s8 %v2112
          %v2114 = vlaneseq
          %v2115 = vshrl.u32 %v2114, 7
          %v2116 = vsub.s32 %v2113, %v2115
          %v2117 = vrot.slane %v2109, %v2116
          %v2119 = vunpack.c.l.s4 1983009808
          %v2120 = vunpack.c.0.s8 %v2119
          %v2121 = vlaneseq
          %v2122 = vshrl.u32 %v2121, 7
          %v2123 = vsub.s32 %v2120, %v2122
          %v2124 = vrot.slane %v2110, %v2123
          %v2125 = vcombine.low %v2117, %v2124
          %v2128 = vpack.c.bf16 %v2108, %v2108
          %v2129 = vpack.c.bf16 %v2125, %v2125
          %vm2130 = vcmask 517120
          %2131 = vst.msk [vmem:[#allocation6] sm:$0x3] %vm2130, 0
          %2132 = vst.msk [vmem:[#allocation6 + $0x8] sm:$0x3] %vm2130, 0
          %vm2133 = vcmask 523270
          %2134 = vst.msk [vmem:[#allocation6] sm:$0xc0] %vm2133, 0
          %2135 = vst.msk [vmem:[#allocation6 + $0x8] sm:$0xc0] %vm2133, 0
          %v2138 = vrot.slane %v2128, 6
          %v2139 = vrot.slane %v2129, 6
          %vm2142 = vcmask 521218
          %2143 = vst.msk [vmem:[#allocation6] sm:$0x3c] %vm2142, %v2138
          %2144 = vst.msk [vmem:[#allocation6 + $0x8] sm:$0x3c] %vm2142, %v2139
          %v2145 = vld [vmem:[#allocation6] sm:$0x8]
          %v2146 = vld [vmem:[#allocation6 + $0x8] sm:$0x8]
          %v2147 = vld [vmem:[#allocation7] sm:$0xf]
          %v2148 = vld [vmem:[#allocation7 + $0x4] sm:$0xf]
          %v2149 = vld [vmem:[#allocation7 + $0x8] sm:$0xf]
          %v2150 = vld [vmem:[#allocation7 + $0xc] sm:$0xf]
          %v2151 = vld [vmem:[#allocation7 + $0x10] sm:$0xf]
          %v2152 = vld [vmem:[#allocation7 + $0x14] sm:$0xf]
          %v2153 = vld [vmem:[#allocation7 + $0x18] sm:$0xf]
          %v2154 = vld [vmem:[#allocation7 + $0x1c] sm:$0xf]
          %v2155 = vld [vmem:[#allocation6] sm:$0x10]
          %v2156 = vld [vmem:[#allocation6 + $0x8] sm:$0x10]
          %s2157 = scalar_lea.vmem [#allocation7], 32
          %v2158 = vld [vmem:[%s2157] sm:$0xf]
          %v2159 = vld [vmem:[%s2157 + $0x4] sm:$0xf]
          %v2160 = vld [vmem:[%s2157 + $0x8] sm:$0xf]
          %v2161 = vld [vmem:[%s2157 + $0xc] sm:$0xf]
          %v2162 = vld [vmem:[%s2157 + $0x10] sm:$0xf]
          %v2163 = vld [vmem:[%s2157 + $0x14] sm:$0xf]
          %v2164 = vld [vmem:[%s2157 + $0x18] sm:$0xf]
          %v2165 = vld [vmem:[%s2157 + $0x1c] sm:$0xf]
          %v2168 = vunpack.c.h.b16 %v2155
          %v2169 = vunpack.c.h.b16 %v2156
          %v2170 = vrot.slane %v2168, 1
          %vm2171 = vcmask 1041409
          %v2172 = vsel %vm2171, %v2169, %v2170
          %v2173 = vpack.c.b16 %v2172, %v2172
          %v2182 = vunpack.c.l.b16 %v2158
          %v2183 = vunpack.c.l.b16 %v2159
          %v2184 = vunpack.c.l.b16 %v2160
          %v2185 = vunpack.c.l.b16 %v2161
          %v2186 = vunpack.c.l.b16 %v2162
          %v2187 = vunpack.c.l.b16 %v2163
          %v2188 = vunpack.c.l.b16 %v2164
          %v2189 = vunpack.c.l.b16 %v2165
          %v2190 = vpack.c.b16 %v2183, %v2182
          %v2191 = vpack.c.b16 %v2185, %v2184
          %v2192 = vpack.c.b16 %v2187, %v2186
          %v2193 = vpack.c.b16 %v2189, %v2188
          %vm2198 = vcmask 523264
          %v2200 = vsel %vm2198, %v2173, 0
          %2202 = vmatprep.subr.bf16.mxu0 0
          %2203 = vmatpush1.bf16.msra.mxu0 %v2190
          %2204 = vmatprep.subr.bf16.mxu0 0
          %2205 = vmatpush1.bf16.msra.mxu0 %v2191
          %2206 = vmatprep.subr.bf16.mxu0 0
          %2207 = vmatpush1.bf16.msra.mxu0 %v2192
          %2208 = vmatprep.subr.bf16.mxu0 0
          %2209 = vmatpush1.bf16.msra.mxu0 %v2193
          %2210 = vmatprep.subr.bf16.mxu0 0
          %2211 = vmatpush1.bf16.msra.mxu0 0
          %2212 = vmatprep.subr.bf16.mxu0 0
          %2213 = vmatpush1.bf16.msra.mxu0 0
          %2214 = vmatprep.subr.bf16.mxu0 0
          %2215 = vmatpush1.bf16.msra.mxu0 0
          %2216 = vmatprep.subr.bf16.mxu0 0
          %2217 = vmatpush1.bf16.msra.mxu0 0
          %2218 = vmatprep.subr.bf16.mxu0 0
          %2219 = vmatpush1.bf16.msra.mxu0 0
          %2220 = vmatprep.subr.bf16.mxu0 0
          %2221 = vmatpush1.bf16.msra.mxu0 0
          %2222 = vmatprep.subr.bf16.mxu0 0
          %2223 = vmatpush1.bf16.msra.mxu0 0
          %2224 = vmatprep.subr.bf16.mxu0 0
          %2225 = vmatpush1.bf16.msra.mxu0 0
          %2226 = vmatprep.subr.bf16.mxu0 0
          %2227 = vmatpush1.bf16.msra.mxu0 0
          %2228 = vmatprep.subr.bf16.mxu0 0
          %2229 = vmatpush1.bf16.msra.mxu0 0
          %2230 = vmatprep.subr.bf16.mxu0 0
          %2231 = vmatpush1.bf16.msra.mxu0 0
          %2232 = vmatprep.subr.bf16.mxu0 0
          %2233 = vmatpush1.bf16.msra.mxu0 0
          %2234 = vmatprep.mubr.bf16.mxu0 0
          %2235 = vmatmul.mubr.bf16.gmra.mrb[0].mxu0 %v2200
          %v2236 = vpop.f32.mrb[0].mxu0
          %v2237 = vadd.f32 0.0, %v2236
          %v2238 = vpop.f32.mrb[0].mxu0
          %v2239 = vpop.f32.mrb[0].mxu0
          %v2240 = vpop.f32.mrb[0].mxu0
          %2241 = vdwg.mxu0
          %v2244 = vunpack.c.l.b16 %v2145
          %v2245 = vunpack.c.l.b16 %v2146
          %v2246 = vrot.slane %v2244, 7
          %v2247 = vrot.slane %v2245, 6
          %v2248 = vsel %vm2171, %v2247, %v2246
          %v2249 = vpack.c.b16 %v2248, %v2248
          %v2258 = vunpack.c.l.b16 %v2147
          %v2259 = vunpack.c.l.b16 %v2148
          %v2260 = vunpack.c.l.b16 %v2149
          %v2261 = vunpack.c.l.b16 %v2150
          %v2262 = vunpack.c.l.b16 %v2151
          %v2263 = vunpack.c.l.b16 %v2152
          %v2264 = vunpack.c.l.b16 %v2153
          %v2265 = vunpack.c.l.b16 %v2154
          %v2266 = vpack.c.b16 %v2259, %v2258
          %v2267 = vpack.c.b16 %v2261, %v2260
          %v2268 = vpack.c.b16 %v2263, %v2262
          %v2269 = vpack.c.b16 %v2265, %v2264
          %v2275 = vsel %vm2198, %v2249, 0
          %2277 = vmatprep.subr.bf16.mxu0 0
          %2278 = vmatpush1.bf16.msra.mxu0 %v2266
          %2279 = vmatprep.subr.bf16.mxu0 0
          %2280 = vmatpush1.bf16.msra.mxu0 %v2267
          %2281 = vmatprep.subr.bf16.mxu0 0
          %2282 = vmatpush1.bf16.msra.mxu0 %v2268
          %2283 = vmatprep.subr.bf16.mxu0 0
          %2284 = vmatpush1.bf16.msra.mxu0 %v2269
          %2285 = vmatprep.subr.bf16.mxu0 0
          %2286 = vmatpush1.bf16.msra.mxu0 0
          %2287 = vmatprep.subr.bf16.mxu0 0
          %2288 = vmatpush1.bf16.msra.mxu0 0
          %2289 = vmatprep.subr.bf16.mxu0 0
          %2290 = vmatpush1.bf16.msra.mxu0 0
          %2291 = vmatprep.subr.bf16.mxu0 0
          %2292 = vmatpush1.bf16.msra.mxu0 0
          %2293 = vmatprep.subr.bf16.mxu0 0
          %2294 = vmatpush1.bf16.msra.mxu0 0
          %2295 = vmatprep.subr.bf16.mxu0 0
          %2296 = vmatpush1.bf16.msra.mxu0 0
          %2297 = vmatprep.subr.bf16.mxu0 0
          %2298 = vmatpush1.bf16.msra.mxu0 0
          %2299 = vmatprep.subr.bf16.mxu0 0
          %2300 = vmatpush1.bf16.msra.mxu0 0
          %2301 = vmatprep.subr.bf16.mxu0 0
          %2302 = vmatpush1.bf16.msra.mxu0 0
          %2303 = vmatprep.subr.bf16.mxu0 0
          %2304 = vmatpush1.bf16.msra.mxu0 0
          %2305 = vmatprep.subr.bf16.mxu0 0
          %2306 = vmatpush1.bf16.msra.mxu0 0
          %2307 = vmatprep.subr.bf16.mxu0 0
          %2308 = vmatpush1.bf16.msra.mxu0 0
          %2309 = vmatprep.mubr.bf16.mxu0 0
          %2310 = vmatmul.mubr.bf16.gmra.mrb[0].mxu0 %v2275
          %v2311 = vpop.f32.mrb[0].mxu0
          %v2312 = vadd.f32 %v2237, %v2311
          %v2313 = vpop.f32.mrb[0].mxu0
          %v2314 = vpop.f32.mrb[0].mxu0
          %v2315 = vpop.f32.mrb[0].mxu0
          %2316 = vdwg.mxu0
          %v2319 = vunpack.c.l.s4 1966171168
          %v2320 = vunpack.c.0.s8 %v2319
          %v2321 = vlaneseq
          %v2322 = vshrl.u32 %v2321, 7
          %v2323 = vsub.s32 %v2320, %v2322
          %v2324 = vrot.slane %v2312, %v2323
          %v2325 = vcombine.high %v2324, %v2324
          %v2327 = vunpack.c.l.s4 1966171168
          %v2328 = vunpack.c.0.s8 %v2327
          %v2329 = vlaneseq
          %v2330 = vshrl.u32 %v2329, 7
          %v2331 = vsub.s32 %v2328, %v2330
          %v2332 = vrot.slane %v2324, %v2331
          %v2334 = vunpack.c.l.s4 1966171168
          %v2335 = vunpack.c.0.s8 %v2334
          %v2336 = vlaneseq
          %v2337 = vshrl.u32 %v2336, 7
          %v2338 = vsub.s32 %v2335, %v2337
          %v2339 = vrot.slane %v2325, %v2338
          %v2342 = vld [vmem:[#allocation6] sm:$0x20]
          %v2343 = vld [vmem:[#allocation6 + $0x8] sm:$0x20]
          %s2344 = scalar_lea.vmem [#allocation7], 64
          %v2345 = vld [vmem:[%s2344] sm:$0xf]
          %v2346 = vld [vmem:[%s2344 + $0x4] sm:$0xf]
          %v2347 = vld [vmem:[%s2344 + $0x8] sm:$0xf]
          %v2348 = vld [vmem:[%s2344 + $0xc] sm:$0xf]
          %v2349 = vld [vmem:[%s2344 + $0x10] sm:$0xf]
          %v2350 = vld [vmem:[%s2344 + $0x14] sm:$0xf]
          %v2351 = vld [vmem:[%s2344 + $0x18] sm:$0xf]
          %v2352 = vld [vmem:[%s2344 + $0x1c] sm:$0xf]
          %v2355 = vunpack.c.h.b16 %v2342
          %v2356 = vunpack.c.h.b16 %v2343
          %v2357 = vrot.slane %v2355, 3
          %v2358 = vrot.slane %v2356, 2
          %v2359 = vsel %vm2171, %v2358, %v2357
          %v2360 = vpack.c.b16 %v2359, %v2359
          %v2369 = vunpack.c.l.b16 %v2345
          %v2370 = vunpack.c.l.b16 %v2346
          %v2371 = vunpack.c.l.b16 %v2347
          %v2372 = vunpack.c.l.b16 %v2348
          %v2373 = vunpack.c.l.b16 %v2349
          %v2374 = vunpack.c.l.b16 %v2350
          %v2375 = vunpack.c.l.b16 %v2351
          %v2376 = vunpack.c.l.b16 %v2352
          %v2377 = vpack.c.b16 %v2370, %v2369
          %v2378 = vpack.c.b16 %v2372, %v2371
          %v2379 = vpack.c.b16 %v2374, %v2373
          %v2380 = vpack.c.b16 %v2376, %v2375
          %v2386 = vsel %vm2198, %v2360, 0
          %2388 = vmatprep.subr.bf16.mxu0 0
          %2389 = vmatpush1.bf16.msra.mxu0 %v2377
          %2390 = vmatprep.subr.bf16.mxu0 0
          %2391 = vmatpush1.bf16.msra.mxu0 %v2378
          %2392 = vmatprep.subr.bf16.mxu0 0
          %2393 = vmatpush1.bf16.msra.mxu0 %v2379
          %2394 = vmatprep.subr.bf16.mxu0 0
          %2395 = vmatpush1.bf16.msra.mxu0 %v2380
          %2396 = vmatprep.subr.bf16.mxu0 0
          %2397 = vmatpush1.bf16.msra.mxu0 0
          %2398 = vmatprep.subr.bf16.mxu0 0
          %2399 = vmatpush1.bf16.msra.mxu0 0
          %2400 = vmatprep.subr.bf16.mxu0 0
          %2401 = vmatpush1.bf16.msra.mxu0 0
          %2402 = vmatprep.subr.bf16.mxu0 0
          %2403 = vmatpush1.bf16.msra.mxu0 0
          %2404 = vmatprep.subr.bf16.mxu0 0
          %2405 = vmatpush1.bf16.msra.mxu0 0
          %2406 = vmatprep.subr.bf16.mxu0 0
          %2407 = vmatpush1.bf16.msra.mxu0 0
          %2408 = vmatprep.subr.bf16.mxu0 0
          %2409 = vmatpush1.bf16.msra.mxu0 0
          %2410 = vmatprep.subr.bf16.mxu0 0
          %2411 = vmatpush1.bf16.msra.mxu0 0
          %2412 = vmatprep.subr.bf16.mxu0 0
          %2413 = vmatpush1.bf16.msra.mxu0 0
          %2414 = vmatprep.subr.bf16.mxu0 0
          %2415 = vmatpush1.bf16.msra.mxu0 0
          %2416 = vmatprep.subr.bf16.mxu0 0
          %2417 = vmatpush1.bf16.msra.mxu0 0
          %2418 = vmatprep.subr.bf16.mxu0 0
          %2419 = vmatpush1.bf16.msra.mxu0 0
          %2420 = vmatprep.mubr.bf16.mxu0 0
          %2421 = vmatmul.mubr.bf16.gmra.mrb[0].mxu0 %v2386
          %v2422 = vpop.f32.mrb[0].mxu0
          %v2423 = vadd.f32 0.0, %v2422
          %v2424 = vpop.f32.mrb[0].mxu0
          %v2425 = vpop.f32.mrb[0].mxu0
          %v2426 = vpop.f32.mrb[0].mxu0
          %2427 = vdwg.mxu0
          %v2430 = vunpack.c.l.s4 1966171168
          %v2431 = vunpack.c.0.s8 %v2430
          %v2432 = vlaneseq
          %v2433 = vshrl.u32 %v2432, 7
          %v2434 = vsub.s32 %v2431, %v2433
          %v2435 = vrot.slane %v2423, %v2434
          %v2436 = vcombine.high %v2435, %v2435
          %v2438 = vunpack.c.l.s4 1966171168
          %v2439 = vunpack.c.0.s8 %v2438
          %v2440 = vlaneseq
          %v2441 = vshrl.u32 %v2440, 7
          %v2442 = vsub.s32 %v2439, %v2441
          %v2443 = vrot.slane %v2435, %v2442
          %v2445 = vunpack.c.l.s4 1966171168
          %v2446 = vunpack.c.0.s8 %v2445
          %v2447 = vlaneseq
          %v2448 = vshrl.u32 %v2447, 7
          %v2449 = vsub.s32 %v2446, %v2448
          %v2450 = vrot.slane %v2436, %v2449
          %v2453 = vadd.f32 %v2332, %v2443
          %v2454 = vadd.f32 %v2339, %v2450
          %v2455 = vld [vmem:[#allocation4] sm:$0x1]
          %v2456 = vrcp.pop 24.0
          %v2457 = vmul.f32 %v2455, %v2456
          %v2458 = vld [vmem:[#allocation5] sm:$0x1]
          %v2459 = vmul.f32 %v2458, %v2456
          %v2460 = vmul.f32 %v2457, %v2457
          %v2461 = vsub.f32 %v2459, %v2460
          %v2462 = vmax.f32 %v2461, 0.0
          %v2463 = vadd.f32 %v2462, 1e-05
          %v2464 = vrsqrt.pop %v2463
          %v2465 = vld [vmem:[%s5] sm:$0x1]
          %v2466 = vmul.f32 %v2465, %v2464
          %v2467 = vld [vmem:[%s6] sm:$0x1]
          %v2468 = vmul.f32 %v2457, %v2466
          %v2469 = vsub.f32 %v2467, %v2468
          %v2471 = vlaneseq
          %v2472 = vshrl.u32 %v2471, 7
          %v2473 = vsub.s32 0, %v2472
          %v2474 = vrot.slane %v2466, %v2473
          %v2476 = vunpack.c.l.s4 1966171168
          %v2477 = vunpack.c.0.s8 %v2476
          %v2478 = vlaneseq
          %v2479 = vshrl.u32 %v2478, 7
          %v2480 = vsub.s32 %v2477, %v2479
          %v2481 = vrot.slane %v2474, %v2480
          %v2482 = vcombine.high %v2481, %v2481
          %v2484 = vunpack.c.l.s4 1966171168
          %v2485 = vunpack.c.0.s8 %v2484
          %v2486 = vlaneseq
          %v2487 = vshrl.u32 %v2486, 7
          %v2488 = vsub.s32 %v2485, %v2487
          %v2489 = vrot.slane %v2481, %v2488
          %v2491 = vunpack.c.l.s4 1966171168
          %v2492 = vunpack.c.0.s8 %v2491
          %v2493 = vlaneseq
          %v2494 = vshrl.u32 %v2493, 7
          %v2495 = vsub.s32 %v2492, %v2494
          %v2496 = vrot.slane %v2482, %v2495
          %v2499 = vmul.f32 %v2453, %v2489
          %v2500 = vmul.f32 %v2454, %v2496
          %v2502 = vlaneseq
          %v2503 = vshrl.u32 %v2502, 7
          %v2504 = vsub.s32 0, %v2503
          %v2505 = vrot.slane %v2469, %v2504
          %v2507 = vunpack.c.l.s4 1966171168
          %v2508 = vunpack.c.0.s8 %v2507
          %v2509 = vlaneseq
          %v2510 = vshrl.u32 %v2509, 7
          %v2511 = vsub.s32 %v2508, %v2510
          %v2512 = vrot.slane %v2505, %v2511
          %v2513 = vcombine.high %v2512, %v2512
          %v2515 = vunpack.c.l.s4 1966171168
          %v2516 = vunpack.c.0.s8 %v2515
          %v2517 = vlaneseq
          %v2518 = vshrl.u32 %v2517, 7
          %v2519 = vsub.s32 %v2516, %v2518
          %v2520 = vrot.slane %v2512, %v2519
          %v2522 = vunpack.c.l.s4 1966171168
          %v2523 = vunpack.c.0.s8 %v2522
          %v2524 = vlaneseq
          %v2525 = vshrl.u32 %v2524, 7
          %v2526 = vsub.s32 %v2523, %v2525
          %v2527 = vrot.slane %v2513, %v2526
          %v2530 = vadd.f32 %v2499, %v2520
          %v2531 = vadd.f32 %v2500, %v2527
          %v2532 = vmax.f32 %v2530, 0.0
          %v2533 = vmax.f32 %v2531, 0.0
          %v2536 = vcombine.low %v2532, %v2533
          %v2538 = vunpack.c.l.s4 1966171168
          %v2539 = vunpack.c.0.s8 %v2538
          %v2540 = vlaneseq
          %v2541 = vshrl.u32 %v2540, 7
          %v2542 = vsub.s32 %v2539, %v2541
          %v2543 = vrot.slane %v2536, %v2542
          %v2545 = vunpack.c.l.s4 1966171168
          %v2546 = vunpack.c.0.s8 %v2545
          %v2547 = vlaneseq
          %v2548 = vshrl.u32 %v2547, 7
          %v2549 = vsub.s32 %v2546, %v2548
          %v2550 = vrot.slane %v2543, %v2549
          %2552 = vst [vmem:[#allocation10] sm:$0x3] %v2550
        $region68: #{tpu_custom_call.1} parent=47 // pred_fallthru
          _
        // Predicated region
        $region69: #{tpu_custom_call.1} parent=47 // pred_check
          %p2553 = pneg %p202
        $region70: #{tpu_custom_call.1} parent=47 // pred_check_branch
          %2555 = sbr.rel (%p2553) target = $region72
        $region71: #{tpu_custom_call.1} parent=47 // pred_region
          %s2557 = ssub.s32 32, 32
          %2558 = vsyncadd [#allocation9], %s2557
          %s2559 = smul.addr %s25, 32
          %s2560 = scalar_lea.hbm %s7, %s2559
          %s2562 = sshll.u32 [#allocation10], 4
          %s2563 = int_to_ptr.vmem [resolvable:$true] %s2562
          %2565 = dma.vmem_to_hbm [thread:$0]  %s2563, 32, %s2560, [#allocation9]
        $region72: #{tpu_custom_call.1} parent=47 // pred_fallthru
          _
        // Predicated region
        $region73: #{tpu_custom_call.1} parent=47 // pred_check
          %p2566 = pneg %p202
        $region74: #{tpu_custom_call.1} parent=47 // pred_check_branch
          %2568 = sbr.rel (%p2566) target = $region76
        $region75: #{tpu_custom_call.1} parent=47 // pred_region
          %2569 = dma.done [#allocation9], 32
        $region76: #{tpu_custom_call.1} parent=47 // pred_fallthru
          _
      $region48: #{tpu_custom_call.1} parent=5 // pred_fallthru
        _
      %p2570 = scmp.le.s32.totalorder 2, %s15
      // Predicated region
      $region77: #{tpu_custom_call.1} parent=5 // pred_check
        %p2571 = pneg %p2570
      $region78: #{tpu_custom_call.1} parent=5 // pred_check_branch
        %2573 = sbr.rel (%p2571) target = $region80
      $region79: #{tpu_custom_call.1} parent=5 // pred_region
        %s2574 = ssub.s32 %s15, 2
      $region80: #{tpu_custom_call.1} parent=5 // pred_fallthru
        _
    $region6: #{tpu_custom_call.1} parent=1 // loop_footer
      %s19 = sadd.s32 1, %s15
    $region7: #{tpu_custom_call.1} parent=1 // loop_footer_branch
      %14 = sbr.rel target = $region3
    $region8: #{tpu_custom_call.1} parent=1 // loop_exit
      _
    %2575 = vsyncpa [#allocation8], 1
    %s2576 = scalar_lea.sflag [#allocation8], 1
    %2577 = vsyncpa %s2576, 1
    %2578 = vsyncpa [#allocation9], 1
    %s2579 = scalar_lea.sflag [#allocation9], 1
    %2580 = vsyncpa %s2579, 1

</llo_original>
